<compile_context>
chip_gen: v6e
topology: v6e:2x2x1
jax: 0.10.0
libtpu: 0.0.40
codegen_flags: <defaults>
</compile_context>

<pallas_src>
import math
import functools

import jax
import jax.numpy as jnp
from jax import lax
from jax.experimental import pallas as pl
from jax.experimental.pallas import tpu as pltpu


def _mha_kernel(vlens_ref, q_ref, k_ref, v_ref, wq_ref, wk_ref, wv_ref, wo_ref,
                out_ref, *, num_heads):
    """Fused multi-head attention for one block of Bt batch elements.

    vlens_ref : SMEM int32[B]        (scalar-prefetched per-batch valid key lengths)
    q_ref     : VMEM (Bt, Lq, Dq)
    k_ref     : VMEM (Bt, Lk, Dk)
    v_ref     : VMEM (Bt, Lk, Dv)
    w*_ref    : VMEM projection weights (replicated across grid steps)
    out_ref   : VMEM (Bt, Lq, H)
    """
    Bt, Lq, Dq = q_ref.shape
    _, Lk, Dk = k_ref.shape
    Dv = v_ref.shape[2]
    H = wq_ref.shape[1]
    dh = H // num_heads
    cdt = q_ref.dtype                      # native MXU operand dtype (bf16 stays bf16)
    inv_sqrt_dh = jnp.float32(1.0 / math.sqrt(dh))

    # ---- input projections, row-packed: (Bt*L) rows feed the MXU in one pass ----
    q2 = q_ref[...].reshape(Bt * Lq, Dq)
    k2 = k_ref[...].reshape(Bt * Lk, Dk)
    v2 = v_ref[...].reshape(Bt * Lk, Dv)

    # Scale Q once by 1/sqrt(d_head) before QK^T (touches Lq*H elems, not Lq*Lk).
    qp = (jnp.dot(q2, wq_ref[...], preferred_element_type=jnp.float32)
          * inv_sqrt_dh).astype(cdt).reshape(Bt, Lq, H)
    kp = jnp.dot(k2, wk_ref[...],
                 preferred_element_type=jnp.float32).astype(cdt).reshape(Bt, Lk, H)
    vp = jnp.dot(v2, wv_ref[...],
                 preferred_element_type=jnp.float32).astype(cdt).reshape(Bt, Lk, H)

    # ---- per-batch key-validity mask, shared by all heads / query rows ----
    # Built once as a boolean (Bt, 1, Lk) slab; broadcast over Lq in the where.
    base = pl.program_id(0) * Bt
    col = lax.broadcasted_iota(jnp.int32, (1, 1, Lk), 2)
    mask = jnp.concatenate(
        [col < vlens_ref[base + j] for j in range(Bt)], axis=0)      # bool (Bt, 1, Lk)
    neg_big = jnp.float32(-1e6)                                       # d2l masked_softmax value

    # ---- attention, static loop over heads (head slices live in the lane dim) ----
    head_out = []
    for h in range(num_heads):
        s = h * dh
        qh = qp[:, :, s:s + dh]                               # (Bt, Lq, dh)
        kh = kp[:, :, s:s + dh]                               # (Bt, Lk, dh)
        vh = vp[:, :, s:s + dh]                               # (Bt, Lk, dh)

        # Contraction on the last dim of both operands -> no k.T materialization.
        scores = jnp.einsum("bqd,bkd->bqk", qh, kh,
                            preferred_element_type=jnp.float32)      # (Bt, Lq, Lk)
        scores = jnp.where(mask, scores, neg_big)

        m = jnp.max(scores, axis=-1, keepdims=True)
        p = jnp.exp(scores - m)
        denom = jnp.sum(p, axis=-1, keepdims=True)
        probs = p * pl.reciprocal(denom, approx=True)                # EUP reciprocal

        # TODO(synk): training-mode dropout would be applied to `probs` here.
        head_out.append(jnp.einsum("bqk,bkd->bqd", probs.astype(cdt), vh,
                                   preferred_element_type=jnp.float32))

    ctx = jnp.concatenate(head_out, axis=-1).astype(cdt)      # (Bt, Lq, H), head-major concat

    # ---- output projection, row-packed again ----
    out = jnp.dot(ctx.reshape(Bt * Lq, H), wo_ref[...],
                  preferred_element_type=jnp.float32)
    out_ref[...] = out.reshape(Bt, Lq, H).astype(out_ref.dtype)


def _choose_batch_block(batch, lq, lk, d_in, d_hidden, itemsize,
                        target_rows=256, vmem_budget_bytes=8 * 1024 * 1024):
    """Pick how many batch elements to pack per grid step.

    Packs rows so the projection matmuls see ~target_rows MXU rows while keeping
    the double-buffered working set far below the smallest (v7x, 64 MiB) VMEM.
    """
    best = 1
    for bt in range(1, batch + 1):
        if batch % bt:
            continue
        tile = bt * (lq * d_in + 2 * lk * d_in + lq * d_hidden) * itemsize * 2
        tile += bt * (lq * lk + 2 * lq * d_hidden + 2 * lk * d_hidden) * 4
        if tile > vmem_budget_bytes:
            break
        best = bt
        if bt * lq >= target_rows:
            break
    return best


def multi_head_attention(queries, keys, values, valid_lens, params, num_heads,
                         dropout=0.0, batch_block=None):
    """Pallas TPU implementation of MultiHeadAttention.forward (eval mode).

    queries: (B, Lq, Dq), keys: (B, Lk, Dk), values: (B, Lk, Dv)
    valid_lens: None or int (B,) per-batch valid key length.
    params: dict of right-multiplication weights w_q (Dq,H), w_k (Dk,H), w_v (Dv,H), w_o (H,H).
    Returns (B, Lq, H).
    """
    del dropout  # nn.Dropout is identity at inference
    wq, wk, wv, wo = params["w_q"], params["w_k"], params["w_v"], params["w_o"]
    B, Lq, Dq = queries.shape
    _, Lk, Dk = keys.shape
    Dv = values.shape[2]
    H = wq.shape[1]
    assert H % num_heads == 0
    assert keys.shape[0] == B and values.shape[0] == B and values.shape[1] == Lk

    if valid_lens is None:
        valid_lens = jnp.full((B,), Lk, dtype=jnp.int32)
    else:
        valid_lens = valid_lens.astype(jnp.int32)

    if batch_block is None:
        batch_block = _choose_batch_block(
            B, Lq, Lk, max(Dq, Dk, Dv, H), H, jnp.dtype(queries.dtype).itemsize)
    Bt = batch_block
    assert B % Bt == 0

    kernel = functools.partial(_mha_kernel, num_heads=num_heads)
    grid_spec = pltpu.PrefetchScalarGridSpec(
        num_scalar_prefetch=1,
        grid=(B // Bt,),
        in_specs=[
            pl.BlockSpec((Bt, Lq, Dq), lambda i, vl: (i, 0, 0)),
            pl.BlockSpec((Bt, Lk, Dk), lambda i, vl: (i, 0, 0)),
            pl.BlockSpec((Bt, Lk, Dv), lambda i, vl: (i, 0, 0)),
            pl.BlockSpec((Dq, H), lambda i, vl: (0, 0)),
            pl.BlockSpec((Dk, H), lambda i, vl: (0, 0)),
            pl.BlockSpec((Dv, H), lambda i, vl: (0, 0)),
            pl.BlockSpec((H, H), lambda i, vl: (0, 0)),
        ],
        out_specs=pl.BlockSpec((Bt, Lq, H), lambda i, vl: (i, 0, 0)),
    )

    return pl.pallas_call(
        kernel,
        grid_spec=grid_spec,
        out_shape=jax.ShapeDtypeStruct((B, Lq, H), queries.dtype),
        compiler_params=pltpu.CompilerParams(
            dimension_semantics=("parallel",),        # batch-block axis -> megacore
            vmem_limit_bytes=32 * 1024 * 1024,        # safe on v5e/v6e/v7x
        ),
    )(valid_lens, queries, keys, values, wq, wk, wv, wo)


def _reference_mha(queries, keys, values, valid_lens, params, num_heads):
    """Pure-JAX replica of the torch MultiHeadAttention forward."""
    def t_qkv(x):
        b, l, h = x.shape
        x = x.reshape(b, l, num_heads, -1).transpose(0, 2, 1, 3)
        return x.reshape(b * num_heads, l, -1)

    q = t_qkv(queries @ params["w_q"])
    k = t_qkv(keys @ params["w_k"])
    v = t_qkv(values @ params["w_v"])
    d = q.shape[-1]
    scores = jnp.einsum("bqd,bkd->bqk", q, k) / math.sqrt(d)
    if valid_lens is not None:
        vl = jnp.repeat(valid_lens, num_heads, axis=0)
        col = jnp.arange(scores.shape[-1])[None, None, :]
        scores = jnp.where(col < vl[:, None, None], scores, -1e6)
    w = jax.nn.softmax(scores, axis=-1)
    out = jnp.einsum("bqk,bkv->bqv", w, v)
    bh, l, dh = out.shape
    out = out.reshape(-1, num_heads, l, dh).transpose(0, 2, 1, 3).reshape(-1, l, num_heads * dh)
    return out @ params["w_o"]


if __name__ == "__main__":
    key = jax.random.PRNGKey(0)
    kq, kk, kv, kwq, kwk, kwv, kwo = jax.random.split(key, 7)

    B, Lq, Lk = 2, 8, 8
    qs = ks = vs = 32          # query/key/value feature sizes
    H, nh = 32, 4              # num_hiddens, num_heads

    queries = jax.random.normal(kq, (B, Lq, qs), dtype=jnp.float32)
    keys = jax.random.normal(kk, (B, Lk, ks), dtype=jnp.float32)
    values = jax.random.normal(kv, (B, Lk, vs), dtype=jnp.float32)
    valid_lens = jnp.array([3, 6], dtype=jnp.int32)

    params = {
        "w_q": jax.random.normal(kwq, (qs, H), jnp.float32) / math.sqrt(qs),
        "w_k": jax.random.normal(kwk, (ks, H), jnp.float32) / math.sqrt(ks),
        "w_v": jax.random.normal(kwv, (vs, H), jnp.float32) / math.sqrt(vs),
        "w_o": jax.random.normal(kwo, (H, H), jnp.float32) / math.sqrt(H),
    }

    out = multi_head_attention(queries, keys, values, valid_lens, params, nh, dropout=0.0)
    out = jax.block_until_ready(out)
    ref = _reference_mha(queries, keys, values, valid_lens, params, nh)
    assert out.shape == ref.shape
    err = float(jnp.max(jnp.abs(out - ref)))
    assert err < 2e-2, f"max abs err (masked case) = {err}"   # approx reciprocal -> ~1e-3

    out_nomask = multi_head_attention(queries, keys, values, None, params, nh, dropout=0.0)
    out_nomask = jax.block_until_ready(out_nomask)
    ref_nomask = _reference_mha(queries, keys, values, None, params, nh)
    err2 = float(jnp.max(jnp.abs(out_nomask - ref_nomask)))
    assert err2 < 2e-2, f"max abs err (unmasked case) = {err2}"

    print("KERNEL_OK")
</pallas_src>

<mosaic_0001>
module attributes {stable_mosaic.version = 11 : i64} {
  func.func @_mha_kernel(%arg0: i32, %arg1: memref<2xi32, #tpu.memory_space<smem>>, %arg2: memref<2x8x32xf32, #tpu.memory_space<vmem>>, %arg3: memref<2x8x32xf32, #tpu.memory_space<vmem>>, %arg4: memref<2x8x32xf32, #tpu.memory_space<vmem>>, %arg5: memref<32x32xf32, #tpu.memory_space<vmem>>, %arg6: memref<32x32xf32, #tpu.memory_space<vmem>>, %arg7: memref<32x32xf32, #tpu.memory_space<vmem>>, %arg8: memref<32x32xf32, #tpu.memory_space<vmem>>, %arg9: memref<2x8x32xf32, #tpu.memory_space<vmem>>) attributes {dimension_semantics = [#tpu.dimension_semantics<parallel>], iteration_bounds = array<i64: 1>, scalar_prefetch = 1 : i64, scratch_operands = 0 : i64, tpu.core_type = #tpu.core_type<tc>, window_params = [{transform_indices = @transform_0, window_bounds = array<i64: 2, 8, 32>}, {transform_indices = @transform_1, window_bounds = array<i64: 2, 8, 32>}, {transform_indices = @transform_2, window_bounds = array<i64: 2, 8, 32>}, {pipeline_mode = #tpu.pipeline_mode<synchronous>, transform_indices = @transform_3, window_bounds = array<i64: 32, 32>}, {pipeline_mode = #tpu.pipeline_mode<synchronous>, transform_indices = @transform_4, window_bounds = array<i64: 32, 32>}, {pipeline_mode = #tpu.pipeline_mode<synchronous>, transform_indices = @transform_5, window_bounds = array<i64: 32, 32>}, {pipeline_mode = #tpu.pipeline_mode<synchronous>, transform_indices = @transform_6, window_bounds = array<i64: 32, 32>}, {transform_indices = @transform_7, window_bounds = array<i64: 2, 8, 32>}]} {
    %c0 = arith.constant 0 : index
    %c0_0 = arith.constant 0 : index
    %c0_1 = arith.constant 0 : index
    %0 = vector.load %arg2[%c0, %c0_0, %c0_1] : memref<2x8x32xf32, #tpu.memory_space<vmem>>, vector<2x8x32xf32>
    %1 = vector.shape_cast %0 : vector<2x8x32xf32> to vector<16x32xf32>
    %c0_2 = arith.constant 0 : index
    %c0_3 = arith.constant 0 : index
    %c0_4 = arith.constant 0 : index
    %2 = vector.load %arg3[%c0_2, %c0_3, %c0_4] : memref<2x8x32xf32, #tpu.memory_space<vmem>>, vector<2x8x32xf32>
    %3 = vector.shape_cast %2 : vector<2x8x32xf32> to vector<16x32xf32>
    %c0_5 = arith.constant 0 : index
    %c0_6 = arith.constant 0 : index
    %c0_7 = arith.constant 0 : index
    %4 = vector.load %arg4[%c0_5, %c0_6, %c0_7] : memref<2x8x32xf32, #tpu.memory_space<vmem>>, vector<2x8x32xf32>
    %5 = vector.shape_cast %4 : vector<2x8x32xf32> to vector<16x32xf32>
    %c0_8 = arith.constant 0 : index
    %c0_9 = arith.constant 0 : index
    %6 = vector.load %arg5[%c0_8, %c0_9] : memref<32x32xf32, #tpu.memory_space<vmem>>, vector<32x32xf32>
    %cst = arith.constant dense<0.000000e+00> : vector<16x32xf32>
    %7 = tpu.matmul %1, %6, %cst {dimension_numbers = #tpu.dot_dimension_numbers<[1], [0], [0], [1], [0, 0, 1, 1], [], []>} : vector<16x32xf32>, vector<32x32xf32>, vector<16x32xf32> -> vector<16x32xf32>
    %cst_10 = arith.constant 0.353553385 : f32
    %8 = vector.broadcast %cst_10 : f32 to vector<16x32xf32>
    %9 = arith.mulf %7, %8 : vector<16x32xf32>
    %10 = vector.shape_cast %9 : vector<16x32xf32> to vector<2x8x32xf32>
    %c0_11 = arith.constant 0 : index
    %c0_12 = arith.constant 0 : index
    %11 = vector.load %arg6[%c0_11, %c0_12] : memref<32x32xf32, #tpu.memory_space<vmem>>, vector<32x32xf32>
    %cst_13 = arith.constant dense<0.000000e+00> : vector<16x32xf32>
    %12 = tpu.matmul %3, %11, %cst_13 {dimension_numbers = #tpu.dot_dimension_numbers<[1], [0], [0], [1], [0, 0, 1, 1], [], []>} : vector<16x32xf32>, vector<32x32xf32>, vector<16x32xf32> -> vector<16x32xf32>
    %13 = vector.shape_cast %12 : vector<16x32xf32> to vector<2x8x32xf32>
    %c0_14 = arith.constant 0 : index
    %c0_15 = arith.constant 0 : index
    %14 = vector.load %arg7[%c0_14, %c0_15] : memref<32x32xf32, #tpu.memory_space<vmem>>, vector<32x32xf32>
    %cst_16 = arith.constant dense<0.000000e+00> : vector<16x32xf32>
    %15 = tpu.matmul %5, %14, %cst_16 {dimension_numbers = #tpu.dot_dimension_numbers<[1], [0], [0], [1], [0, 0, 1, 1], [], []>} : vector<16x32xf32>, vector<32x32xf32>, vector<16x32xf32> -> vector<16x32xf32>
    %16 = vector.shape_cast %15 : vector<16x32xf32> to vector<2x8x32xf32>
    %c2_i32 = arith.constant 2 : i32
    %17 = arith.muli %arg0, %c2_i32 : i32
    %18 = tpu.iota {dimensions = array<i32: 2>} : vector<1x1x8xi32>
    %c0_i32 = arith.constant 0 : i32
    %19 = arith.addi %17, %c0_i32 : i32
    %20 = arith.index_cast %19 : i32 to index
    %21 = memref.load %arg1[%20] : memref<2xi32, #tpu.memory_space<smem>>
    %22 = vector.broadcast %21 : i32 to vector<1x1x8xi32>
    %23 = arith.cmpi slt, %18, %22 : vector<1x1x8xi32>
    %c1_i32 = arith.constant 1 : i32
    %24 = arith.addi %17, %c1_i32 : i32
    %25 = arith.index_cast %24 : i32 to index
    %26 = memref.load %arg1[%25] : memref<2xi32, #tpu.memory_space<smem>>
    %27 = vector.broadcast %26 : i32 to vector<1x1x8xi32>
    %28 = arith.cmpi slt, %18, %27 : vector<1x1x8xi32>
    %29 = tpu.concatenate %23, %28 in 0 : vector<1x1x8xi1>, vector<1x1x8xi1> -> vector<2x1x8xi1>
    %30 = vector.extract_strided_slice %10 {offsets = [0, 0, 0], sizes = [2, 8, 8], strides = [1, 1, 1]} : vector<2x8x32xf32> to vector<2x8x8xf32>
    %31 = vector.extract_strided_slice %13 {offsets = [0, 0, 0], sizes = [2, 8, 8], strides = [1, 1, 1]} : vector<2x8x32xf32> to vector<2x8x8xf32>
    %32 = vector.extract_strided_slice %16 {offsets = [0, 0, 0], sizes = [2, 8, 8], strides = [1, 1, 1]} : vector<2x8x32xf32> to vector<2x8x8xf32>
    "tpu.trace_start"() <{level = 10 : i32, message = "bqd,bkd->bqk"}> : () -> ()
    %cst_17 = arith.constant dense<0.000000e+00> : vector<2x8x8xf32>
    %33 = tpu.matmul %30, %31, %cst_17 {dimension_numbers = #tpu.dot_dimension_numbers<[2], [2], [1], [1], [0, 0, 0, 1, 1, 1], [0], [0]>} : vector<2x8x8xf32>, vector<2x8x8xf32>, vector<2x8x8xf32> -> vector<2x8x8xf32>
    %cst_18 = arith.constant -1.000000e+06 : f32
    "tpu.trace_stop"() : () -> ()
    %34 = vector.shape_cast %29 : vector<2x1x8xi1> to vector<2x1x8xi1>
    %35 = vector.broadcast %34 : vector<2x1x8xi1> to vector<2x8x8xi1>
    %36 = vector.broadcast %cst_18 : f32 to vector<2x8x8xf32>
    %37 = arith.select %35, %33, %36 : vector<2x8x8xi1>, vector<2x8x8xf32>
    %cst_19 = arith.constant dense<0xFF800000> : vector<2x8xf32>
    %38 = vector.multi_reduction <maximumf>, %37, %cst_19 [2] : vector<2x8x8xf32> to vector<2x8xf32>
    %39 = vector.shape_cast %38 : vector<2x8xf32> to vector<2x8x1xf32>
    %40 = vector.broadcast %39 : vector<2x8x1xf32> to vector<2x8x8xf32>
    %41 = arith.subf %37, %40 : vector<2x8x8xf32>
    %42 = math.exp %41 : vector<2x8x8xf32>
    %cst_20 = arith.constant dense<0.000000e+00> : vector<2x8xf32>
    %43 = vector.multi_reduction <add>, %42, %cst_20 [2] : vector<2x8x8xf32> to vector<2x8xf32>
    %44 = vector.shape_cast %43 : vector<2x8xf32> to vector<2x8x1xf32>
    %45 = tpu.reciprocal %44 {approx = true} : vector<2x8x1xf32> -> vector<2x8x1xf32>
    %46 = vector.broadcast %45 : vector<2x8x1xf32> to vector<2x8x8xf32>
    %47 = arith.mulf %42, %46 : vector<2x8x8xf32>
    "tpu.trace_start"() <{level = 10 : i32, message = "bqk,bkd->bqd"}> : () -> ()
    %cst_21 = arith.constant dense<0.000000e+00> : vector<2x8x8xf32>
    %48 = tpu.matmul %47, %32, %cst_21 {dimension_numbers = #tpu.dot_dimension_numbers<[2], [1], [1], [2], [0, 0, 0, 1, 1, 2], [0], [0]>} : vector<2x8x8xf32>, vector<2x8x8xf32>, vector<2x8x8xf32> -> vector<2x8x8xf32>
    "tpu.trace_stop"() : () -> ()
    %49 = vector.extract_strided_slice %10 {offsets = [0, 0, 8], sizes = [2, 8, 8], strides = [1, 1, 1]} : vector<2x8x32xf32> to vector<2x8x8xf32>
    %50 = vector.extract_strided_slice %13 {offsets = [0, 0, 8], sizes = [2, 8, 8], strides = [1, 1, 1]} : vector<2x8x32xf32> to vector<2x8x8xf32>
    %51 = vector.extract_strided_slice %16 {offsets = [0, 0, 8], sizes = [2, 8, 8], strides = [1, 1, 1]} : vector<2x8x32xf32> to vector<2x8x8xf32>
    "tpu.trace_start"() <{level = 10 : i32, message = "bqd,bkd->bqk"}> : () -> ()
    %cst_22 = arith.constant dense<0.000000e+00> : vector<2x8x8xf32>
    %52 = tpu.matmul %49, %50, %cst_22 {dimension_numbers = #tpu.dot_dimension_numbers<[2], [2], [1], [1], [0, 0, 0, 1, 1, 1], [0], [0]>} : vector<2x8x8xf32>, vector<2x8x8xf32>, vector<2x8x8xf32> -> vector<2x8x8xf32>
    %cst_23 = arith.constant -1.000000e+06 : f32
    "tpu.trace_stop"() : () -> ()
    %53 = vector.shape_cast %29 : vector<2x1x8xi1> to vector<2x1x8xi1>
    %54 = vector.broadcast %53 : vector<2x1x8xi1> to vector<2x8x8xi1>
    %55 = vector.broadcast %cst_23 : f32 to vector<2x8x8xf32>
    %56 = arith.select %54, %52, %55 : vector<2x8x8xi1>, vector<2x8x8xf32>
    %cst_24 = arith.constant dense<0xFF800000> : vector<2x8xf32>
    %57 = vector.multi_reduction <maximumf>, %56, %cst_24 [2] : vector<2x8x8xf32> to vector<2x8xf32>
    %58 = vector.shape_cast %57 : vector<2x8xf32> to vector<2x8x1xf32>
    %59 = vector.broadcast %58 : vector<2x8x1xf32> to vector<2x8x8xf32>
    %60 = arith.subf %56, %59 : vector<2x8x8xf32>
    %61 = math.exp %60 : vector<2x8x8xf32>
    %cst_25 = arith.constant dense<0.000000e+00> : vector<2x8xf32>
    %62 = vector.multi_reduction <add>, %61, %cst_25 [2] : vector<2x8x8xf32> to vector<2x8xf32>
    %63 = vector.shape_cast %62 : vector<2x8xf32> to vector<2x8x1xf32>
    %64 = tpu.reciprocal %63 {approx = true} : vector<2x8x1xf32> -> vector<2x8x1xf32>
    %65 = vector.broadcast %64 : vector<2x8x1xf32> to vector<2x8x8xf32>
    %66 = arith.mulf %61, %65 : vector<2x8x8xf32>
    "tpu.trace_start"() <{level = 10 : i32, message = "bqk,bkd->bqd"}> : () -> ()
    %cst_26 = arith.constant dense<0.000000e+00> : vector<2x8x8xf32>
    %67 = tpu.matmul %66, %51, %cst_26 {dimension_numbers = #tpu.dot_dimension_numbers<[2], [1], [1], [2], [0, 0, 0, 1, 1, 2], [0], [0]>} : vector<2x8x8xf32>, vector<2x8x8xf32>, vector<2x8x8xf32> -> vector<2x8x8xf32>
    "tpu.trace_stop"() : () -> ()
    %68 = vector.extract_strided_slice %10 {offsets = [0, 0, 16], sizes = [2, 8, 8], strides = [1, 1, 1]} : vector<2x8x32xf32> to vector<2x8x8xf32>
    %69 = vector.extract_strided_slice %13 {offsets = [0, 0, 16], sizes = [2, 8, 8], strides = [1, 1, 1]} : vector<2x8x32xf32> to vector<2x8x8xf32>
    %70 = vector.extract_strided_slice %16 {offsets = [0, 0, 16], sizes = [2, 8, 8], strides = [1, 1, 1]} : vector<2x8x32xf32> to vector<2x8x8xf32>
    "tpu.trace_start"() <{level = 10 : i32, message = "bqd,bkd->bqk"}> : () -> ()
    %cst_27 = arith.constant dense<0.000000e+00> : vector<2x8x8xf32>
    %71 = tpu.matmul %68, %69, %cst_27 {dimension_numbers = #tpu.dot_dimension_numbers<[2], [2], [1], [1], [0, 0, 0, 1, 1, 1], [0], [0]>} : vector<2x8x8xf32>, vector<2x8x8xf32>, vector<2x8x8xf32> -> vector<2x8x8xf32>
    %cst_28 = arith.constant -1.000000e+06 : f32
    "tpu.trace_stop"() : () -> ()
    %72 = vector.shape_cast %29 : vector<2x1x8xi1> to vector<2x1x8xi1>
    %73 = vector.broadcast %72 : vector<2x1x8xi1> to vector<2x8x8xi1>
    %74 = vector.broadcast %cst_28 : f32 to vector<2x8x8xf32>
    %75 = arith.select %73, %71, %74 : vector<2x8x8xi1>, vector<2x8x8xf32>
    %cst_29 = arith.constant dense<0xFF800000> : vector<2x8xf32>
    %76 = vector.multi_reduction <maximumf>, %75, %cst_29 [2] : vector<2x8x8xf32> to vector<2x8xf32>
    %77 = vector.shape_cast %76 : vector<2x8xf32> to vector<2x8x1xf32>
    %78 = vector.broadcast %77 : vector<2x8x1xf32> to vector<2x8x8xf32>
    %79 = arith.subf %75, %78 : vector<2x8x8xf32>
    %80 = math.exp %79 : vector<2x8x8xf32>
    %cst_30 = arith.constant dense<0.000000e+00> : vector<2x8xf32>
    %81 = vector.multi_reduction <add>, %80, %cst_30 [2] : vector<2x8x8xf32> to vector<2x8xf32>
    %82 = vector.shape_cast %81 : vector<2x8xf32> to vector<2x8x1xf32>
    %83 = tpu.reciprocal %82 {approx = true} : vector<2x8x1xf32> -> vector<2x8x1xf32>
    %84 = vector.broadcast %83 : vector<2x8x1xf32> to vector<2x8x8xf32>
    %85 = arith.mulf %80, %84 : vector<2x8x8xf32>
    "tpu.trace_start"() <{level = 10 : i32, message = "bqk,bkd->bqd"}> : () -> ()
    %cst_31 = arith.constant dense<0.000000e+00> : vector<2x8x8xf32>
    %86 = tpu.matmul %85, %70, %cst_31 {dimension_numbers = #tpu.dot_dimension_numbers<[2], [1], [1], [2], [0, 0, 0, 1, 1, 2], [0], [0]>} : vector<2x8x8xf32>, vector<2x8x8xf32>, vector<2x8x8xf32> -> vector<2x8x8xf32>
    "tpu.trace_stop"() : () -> ()
    %87 = vector.extract_strided_slice %10 {offsets = [0, 0, 24], sizes = [2, 8, 8], strides = [1, 1, 1]} : vector<2x8x32xf32> to vector<2x8x8xf32>
    %88 = vector.extract_strided_slice %13 {offsets = [0, 0, 24], sizes = [2, 8, 8], strides = [1, 1, 1]} : vector<2x8x32xf32> to vector<2x8x8xf32>
    %89 = vector.extract_strided_slice %16 {offsets = [0, 0, 24], sizes = [2, 8, 8], strides = [1, 1, 1]} : vector<2x8x32xf32> to vector<2x8x8xf32>
    "tpu.trace_start"() <{level = 10 : i32, message = "bqd,bkd->bqk"}> : () -> ()
    %cst_32 = arith.constant dense<0.000000e+00> : vector<2x8x8xf32>
    %90 = tpu.matmul %87, %88, %cst_32 {dimension_numbers = #tpu.dot_dimension_numbers<[2], [2], [1], [1], [0, 0, 0, 1, 1, 1], [0], [0]>} : vector<2x8x8xf32>, vector<2x8x8xf32>, vector<2x8x8xf32> -> vector<2x8x8xf32>
    %cst_33 = arith.constant -1.000000e+06 : f32
    "tpu.trace_stop"() : () -> ()
    %91 = vector.shape_cast %29 : vector<2x1x8xi1> to vector<2x1x8xi1>
    %92 = vector.broadcast %91 : vector<2x1x8xi1> to vector<2x8x8xi1>
    %93 = vector.broadcast %cst_33 : f32 to vector<2x8x8xf32>
    %94 = arith.select %92, %90, %93 : vector<2x8x8xi1>, vector<2x8x8xf32>
    %cst_34 = arith.constant dense<0xFF800000> : vector<2x8xf32>
    %95 = vector.multi_reduction <maximumf>, %94, %cst_34 [2] : vector<2x8x8xf32> to vector<2x8xf32>
    %96 = vector.shape_cast %95 : vector<2x8xf32> to vector<2x8x1xf32>
    %97 = vector.broadcast %96 : vector<2x8x1xf32> to vector<2x8x8xf32>
    %98 = arith.subf %94, %97 : vector<2x8x8xf32>
    %99 = math.exp %98 : vector<2x8x8xf32>
    %cst_35 = arith.constant dense<0.000000e+00> : vector<2x8xf32>
    %100 = vector.multi_reduction <add>, %99, %cst_35 [2] : vector<2x8x8xf32> to vector<2x8xf32>
    %101 = vector.shape_cast %100 : vector<2x8xf32> to vector<2x8x1xf32>
    %102 = tpu.reciprocal %101 {approx = true} : vector<2x8x1xf32> -> vector<2x8x1xf32>
    %103 = vector.broadcast %102 : vector<2x8x1xf32> to vector<2x8x8xf32>
    %104 = arith.mulf %99, %103 : vector<2x8x8xf32>
    "tpu.trace_start"() <{level = 10 : i32, message = "bqk,bkd->bqd"}> : () -> ()
    %cst_36 = arith.constant dense<0.000000e+00> : vector<2x8x8xf32>
    %105 = tpu.matmul %104, %89, %cst_36 {dimension_numbers = #tpu.dot_dimension_numbers<[2], [1], [1], [2], [0, 0, 0, 1, 1, 2], [0], [0]>} : vector<2x8x8xf32>, vector<2x8x8xf32>, vector<2x8x8xf32> -> vector<2x8x8xf32>
    "tpu.trace_stop"() : () -> ()
    %106 = tpu.concatenate %48, %67, %86, %105 in 2 : vector<2x8x8xf32>, vector<2x8x8xf32>, vector<2x8x8xf32>, vector<2x8x8xf32> -> vector<2x8x32xf32>
    %107 = vector.shape_cast %106 : vector<2x8x32xf32> to vector<16x32xf32>
    %c0_37 = arith.constant 0 : index
    %c0_38 = arith.constant 0 : index
    %108 = vector.load %arg8[%c0_37, %c0_38] : memref<32x32xf32, #tpu.memory_space<vmem>>, vector<32x32xf32>
    %cst_39 = arith.constant dense<0.000000e+00> : vector<16x32xf32>
    %109 = tpu.matmul %107, %108, %cst_39 {dimension_numbers = #tpu.dot_dimension_numbers<[1], [0], [0], [1], [0, 0, 1, 1], [], []>} : vector<16x32xf32>, vector<32x32xf32>, vector<16x32xf32> -> vector<16x32xf32>
    %110 = vector.shape_cast %109 : vector<16x32xf32> to vector<2x8x32xf32>
    %c0_40 = arith.constant 0 : index
    %c0_41 = arith.constant 0 : index
    %c0_42 = arith.constant 0 : index
    %111 = vector.load %arg9[%c0_40, %c0_41, %c0_42] : memref<2x8x32xf32, #tpu.memory_space<vmem>>, vector<2x8x32xf32>
    tpu.vector_store %arg9[%c0_40, %c0_41, %c0_42], %110 {strides = array<i32>} : memref<2x8x32xf32, #tpu.memory_space<vmem>>, vector<2x8x32xf32>,
    return
  }
  func.func @transform_0(%arg0: i32, %arg1: memref<2xi32, #tpu.memory_space<smem>>) -> (i32, i32, i32) {
    %c0_i32 = arith.constant 0 : i32
    %c0_i32_0 = arith.constant 0 : i32
    %c0_i32_1 = arith.constant 0 : i32
    return %arg0, %c0_i32, %c0_i32_0 : i32, i32, i32
  }
  func.func @transform_1(%arg0: i32, %arg1: memref<2xi32, #tpu.memory_space<smem>>) -> (i32, i32, i32) {
    %c0_i32 = arith.constant 0 : i32
    %c0_i32_0 = arith.constant 0 : i32
    %c0_i32_1 = arith.constant 0 : i32
    return %arg0, %c0_i32, %c0_i32_0 : i32, i32, i32
  }
  func.func @transform_2(%arg0: i32, %arg1: memref<2xi32, #tpu.memory_space<smem>>) -> (i32, i32, i32) {
    %c0_i32 = arith.constant 0 : i32
    %c0_i32_0 = arith.constant 0 : i32
    %c0_i32_1 = arith.constant 0 : i32
    return %arg0, %c0_i32, %c0_i32_0 : i32, i32, i32
  }
  func.func @transform_3(%arg0: i32, %arg1: memref<2xi32, #tpu.memory_space<smem>>) -> (i32, i32) {
    %c0_i32 = arith.constant 0 : i32
    %c0_i32_0 = arith.constant 0 : i32
    %c0_i32_1 = arith.constant 0 : i32
    return %c0_i32, %c0_i32_0 : i32, i32
  }
  func.func @transform_4(%arg0: i32, %arg1: memref<2xi32, #tpu.memory_space<smem>>) -> (i32, i32) {
    %c0_i32 = arith.constant 0 : i32
    %c0_i32_0 = arith.constant 0 : i32
    %c0_i32_1 = arith.constant 0 : i32
    return %c0_i32, %c0_i32_0 : i32, i32
  }
  func.func @transform_5(%arg0: i32, %arg1: memref<2xi32, #tpu.memory_space<smem>>) -> (i32, i32) {
    %c0_i32 = arith.constant 0 : i32
    %c0_i32_0 = arith.constant 0 : i32
    %c0_i32_1 = arith.constant 0 : i32
    return %c0_i32, %c0_i32_0 : i32, i32
  }
  func.func @transform_6(%arg0: i32, %arg1: memref<2xi32, #tpu.memory_space<smem>>) -> (i32, i32) {
    %c0_i32 = arith.constant 0 : i32
    %c0_i32_0 = arith.constant 0 : i32
    %c0_i32_1 = arith.constant 0 : i32
    return %c0_i32, %c0_i32_0 : i32, i32
  }
  func.func @transform_7(%arg0: i32, %arg1: memref<2xi32, #tpu.memory_space<smem>>) -> (i32, i32, i32) {
    %c0_i32 = arith.constant 0 : i32
    %c0_i32_0 = arith.constant 0 : i32
    %c0_i32_1 = arith.constant 0 : i32
    return %arg0, %c0_i32, %c0_i32_0 : i32, i32, i32
  }
}

</mosaic_0001>

<llo_original>
// kernel: tpu_custom_call.1
$region0: #{tpu_custom_call.1}
  #allocation0 [shape = 'u32[]', space=smem, size = 0x4, offset = 0x4, fixed_abs, tag = 'smem constant byte address 0x4 - core index']
  #allocation1 [shape = 'u32[144,128]{1,0:T(1,128)}', space=vmem, size = 0x12000, scoped, tag = 'internal scratch']
  #allocation2 [shape = 's32[1]{0}', space=sflag, size = 0x4, scoped, tag = 'scoped memory for tpu_custom_call.1']
  #allocation3 [shape = 'u8[512]{0}', space=smem, size = 0x200, scoped, tag = 'prefetched SMEM operand 0']
  %s0 = inlined_call_operand.hbm [shape: s32[2], index: 0, kind: input, shape index: {}]
  %s1 = inlined_call_operand.hbm [shape: f32[2,8,32], index: 1, kind: input, shape index: {}]
  %s2 = inlined_call_operand.hbm [shape: f32[2,8,32], index: 2, kind: input, shape index: {}]
  %s3 = inlined_call_operand.hbm [shape: f32[2,8,32], index: 3, kind: input, shape index: {}]
  %s4 = inlined_call_operand.hbm [shape: f32[32,32], index: 4, kind: input, shape index: {}]
  %s5 = inlined_call_operand.hbm [shape: f32[32,32], index: 5, kind: input, shape index: {}]
  %s6 = inlined_call_operand.hbm [shape: f32[32,32], index: 6, kind: input, shape index: {}]
  %s7 = inlined_call_operand.hbm [shape: f32[32,32], index: 7, kind: input, shape index: {}]
  %s8 = inlined_call_operand.hbm [shape: f32[2,8,32], index: 8, kind: output, shape index: {}]
  %s9 = sld [smem:[#allocation0]]
  $region66: #{tpu_custom_call.1} parent=0
    _
  %s11 = ssub.s32 1, %s9
  %s12 = scalar_select 0, %s11, %s9
  %14 = dma.hbm_to_smem %s0, 16, [#allocation3], [#allocation2]
  %15 = dma.done [#allocation2], 16
  %16 = sfence
  $region1: #{tpu_custom_call.1} parent=0
    #allocation4 [shape = 'u8[8192]{0}', space=vmem, size = 0x2000, scoped, tag = 'input window, operand 1, single buffered']
    #allocation5 [shape = 's32[1]{0}', space=sflag, size = 0x4, scoped, tag = 'scoped memory for tpu_custom_call.1']
    #allocation6 [shape = 's32[1]{0}', space=sflag, size = 0x4, scoped, tag = 'scoped memory for tpu_custom_call.1']
    #allocation7 [shape = 'u8[8192]{0}', space=vmem, size = 0x2000, scoped, tag = 'input window, operand 2, single buffered']
    #allocation8 [shape = 's32[1]{0}', space=sflag, size = 0x4, scoped, tag = 'scoped memory for tpu_custom_call.1']
    #allocation9 [shape = 'u8[8192]{0}', space=vmem, size = 0x2000, scoped, tag = 'input window, operand 3, single buffered']
    #allocation10 [shape = 'u8[16384]{0}', space=vmem, size = 0x4000, scoped, tag = 'input window, operand 4, single buffered']
    #allocation11 [shape = 's32[1]{0}', space=sflag, size = 0x4, scoped, tag = 'scoped memory for tpu_custom_call.1']
    #allocation12 [shape = 'u8[16384]{0}', space=vmem, size = 0x4000, scoped, tag = 'input window, operand 5, single buffered']
    #allocation13 [shape = 'u8[16384]{0}', space=vmem, size = 0x4000, scoped, tag = 'input window, operand 6, single buffered']
    #allocation14 [shape = 's32[1]{0}', space=sflag, size = 0x4, scoped, tag = 'scoped memory for tpu_custom_call.1']
    #allocation15 [shape = 'u8[16384]{0}', space=vmem, size = 0x4000, scoped, tag = 'input window, operand 7, single buffered']
    #allocation16 [shape = 'u8[8192]{0}', space=vmem, size = 0x2000, scoped, tag = 'output window, operand 0, single buffered']
    %17 = vsyncpa [#allocation5], 0
    %18 = vsyncpa [#allocation8], 0
    %19 = vsyncpa [#allocation11], 0
    %20 = vsyncpa [#allocation14], 0
    %21 = vsyncpa [#allocation6], 0
    // Predicated region
    $region2: #{tpu_custom_call.1} parent=1 // pred_check
      _
    $region3: #{tpu_custom_call.1} parent=1 // pred_check_branch
      %23 = sbr.rel (0) target = $region5
    $region4: #{tpu_custom_call.1} parent=1 // pred_region
      %s25 = ssub.s32 256, 256
      %26 = vsyncadd [#allocation5], %s25
      %s27 = sshll.u32 [#allocation4], 4
      %s28 = int_to_ptr.vmem [resolvable:$true] %s27
      %33 = dma.hbm_to_vmem [thread:$0]  %s1, 256, %s28, [#allocation5], 128, 128, 8
    $region5: #{tpu_custom_call.1} parent=1 // pred_fallthru
      _
    // Predicated region
    $region6: #{tpu_custom_call.1} parent=1 // pred_check
      _
    $region7: #{tpu_custom_call.1} parent=1 // pred_check_branch
      %35 = sbr.rel (0) target = $region9
    $region8: #{tpu_custom_call.1} parent=1 // pred_region
      %s37 = ssub.s32 256, 256
      %38 = vsyncadd [#allocation8], %s37
      %s39 = sshll.u32 [#allocation7], 4
      %s40 = int_to_ptr.vmem [resolvable:$true] %s39
      %45 = dma.hbm_to_vmem [thread:$0]  %s2, 256, %s40, [#allocation8], 128, 128, 8
    $region9: #{tpu_custom_call.1} parent=1 // pred_fallthru
      _
    // Predicated region
    $region10: #{tpu_custom_call.1} parent=1 // pred_check
      _
    $region11: #{tpu_custom_call.1} parent=1 // pred_check_branch
      %47 = sbr.rel (0) target = $region13
    $region12: #{tpu_custom_call.1} parent=1 // pred_region
      %s49 = ssub.s32 256, 256
      %50 = vsyncadd [#allocation8], %s49
      %s51 = sshll.u32 [#allocation9], 4
      %s52 = int_to_ptr.vmem [resolvable:$true] %s51
      %57 = dma.hbm_to_vmem [thread:$0]  %s3, 256, %s52, [#allocation8], 128, 128, 8
    $region13: #{tpu_custom_call.1} parent=1 // pred_fallthru
      _
    // Predicated region
    $region14: #{tpu_custom_call.1} parent=1 // pred_check
      _
    $region15: #{tpu_custom_call.1} parent=1 // pred_check_branch
      %59 = sbr.rel (0) target = $region17
    $region16: #{tpu_custom_call.1} parent=1 // pred_region
      %s61 = ssub.s32 512, 512
      %62 = vsyncadd [#allocation11], %s61
      %s63 = sshll.u32 [#allocation10], 4
      %s64 = int_to_ptr.vmem [resolvable:$true] %s63
      %69 = dma.hbm_to_vmem [thread:$0]  %s4, 512, %s64, [#allocation11], 128, 128, 8
    $region17: #{tpu_custom_call.1} parent=1 // pred_fallthru
      _
    // Predicated region
    $region18: #{tpu_custom_call.1} parent=1 // pred_check
      _
    $region19: #{tpu_custom_call.1} parent=1 // pred_check_branch
      %71 = sbr.rel (0) target = $region21
    $region20: #{tpu_custom_call.1} parent=1 // pred_region
      %s73 = ssub.s32 512, 512
      %74 = vsyncadd [#allocation11], %s73
      %s75 = sshll.u32 [#allocation12], 4
      %s76 = int_to_ptr.vmem [resolvable:$true] %s75
      %81 = dma.hbm_to_vmem [thread:$0]  %s5, 512, %s76, [#allocation11], 128, 128, 8
    $region21: #{tpu_custom_call.1} parent=1 // pred_fallthru
      _
    // Predicated region
    $region22: #{tpu_custom_call.1} parent=1 // pred_check
      _
    $region23: #{tpu_custom_call.1} parent=1 // pred_check_branch
      %83 = sbr.rel (0) target = $region25
    $region24: #{tpu_custom_call.1} parent=1 // pred_region
      %s85 = ssub.s32 512, 512
      %86 = vsyncadd [#allocation14], %s85
      %s87 = sshll.u32 [#allocation13], 4
      %s88 = int_to_ptr.vmem [resolvable:$true] %s87
      %93 = dma.hbm_to_vmem [thread:$0]  %s6, 512, %s88, [#allocation14], 128, 128, 8
    $region25: #{tpu_custom_call.1} parent=1 // pred_fallthru
      _
    // Predicated region
    $region26: #{tpu_custom_call.1} parent=1 // pred_check
      _
    $region27: #{tpu_custom_call.1} parent=1 // pred_check_branch
      %95 = sbr.rel (0) target = $region29
    $region28: #{tpu_custom_call.1} parent=1 // pred_region
      %s97 = ssub.s32 512, 512
      %98 = vsyncadd [#allocation14], %s97
      %s99 = sshll.u32 [#allocation15], 4
      %s100 = int_to_ptr.vmem [resolvable:$true] %s99
      %105 = dma.hbm_to_vmem [thread:$0]  %s7, 512, %s100, [#allocation14], 128, 128, 8
    $region29: #{tpu_custom_call.1} parent=1 // pred_fallthru
      _
    // Predicated region
    $region30: #{tpu_custom_call.1} parent=1 // pred_check
      _
    $region31: #{tpu_custom_call.1} parent=1 // pred_check_branch
      %107 = sbr.rel (0) target = $region33
    $region32: #{tpu_custom_call.1} parent=1 // pred_region
      %108 = dma.done [#allocation5], 256
    $region33: #{tpu_custom_call.1} parent=1 // pred_fallthru
      _
    // Predicated region
    $region34: #{tpu_custom_call.1} parent=1 // pred_check
      _
    $region35: #{tpu_custom_call.1} parent=1 // pred_check_branch
      %110 = sbr.rel (0) target = $region37
    $region36: #{tpu_custom_call.1} parent=1 // pred_region
      %111 = dma.done [#allocation8], 256
    $region37: #{tpu_custom_call.1} parent=1 // pred_fallthru
      _
    // Predicated region
    $region38: #{tpu_custom_call.1} parent=1 // pred_check
      _
    $region39: #{tpu_custom_call.1} parent=1 // pred_check_branch
      %113 = sbr.rel (0) target = $region41
    $region40: #{tpu_custom_call.1} parent=1 // pred_region
      %114 = dma.done [#allocation8], 256
    $region41: #{tpu_custom_call.1} parent=1 // pred_fallthru
      _
    // Predicated region
    $region42: #{tpu_custom_call.1} parent=1 // pred_check
      _
    $region43: #{tpu_custom_call.1} parent=1 // pred_check_branch
      %116 = sbr.rel (0) target = $region45
    $region44: #{tpu_custom_call.1} parent=1 // pred_region
      %117 = dma.done [#allocation11], 512
    $region45: #{tpu_custom_call.1} parent=1 // pred_fallthru
      _
    // Predicated region
    $region46: #{tpu_custom_call.1} parent=1 // pred_check
      _
    $region47: #{tpu_custom_call.1} parent=1 // pred_check_branch
      %119 = sbr.rel (0) target = $region49
    $region48: #{tpu_custom_call.1} parent=1 // pred_region
      %120 = dma.done [#allocation11], 512
    $region49: #{tpu_custom_call.1} parent=1 // pred_fallthru
      _
    // Predicated region
    $region50: #{tpu_custom_call.1} parent=1 // pred_check
      _
    $region51: #{tpu_custom_call.1} parent=1 // pred_check_branch
      %122 = sbr.rel (0) target = $region53
    $region52: #{tpu_custom_call.1} parent=1 // pred_region
      %123 = dma.done [#allocation14], 512
    $region53: #{tpu_custom_call.1} parent=1 // pred_fallthru
      _
    // Predicated region
    $region54: #{tpu_custom_call.1} parent=1 // pred_check
      _
    $region55: #{tpu_custom_call.1} parent=1 // pred_check_branch
      %125 = sbr.rel (0) target = $region57
    $region56: #{tpu_custom_call.1} parent=1 // pred_region
      %126 = dma.done [#allocation14], 512
    $region57: #{tpu_custom_call.1} parent=1 // pred_fallthru
      _
    %v127 = vld [vmem:[#allocation4] sm:$0xff]
    %v128 = vld [vmem:[#allocation4 + $0x8] sm:$0xff]
    %v129 = vld [vmem:[#allocation7] sm:$0xff]
    %v130 = vld [vmem:[#allocation7 + $0x8] sm:$0xff]
    %v131 = vld [vmem:[#allocation9] sm:$0xff]
    %v132 = vld [vmem:[#allocation9 + $0x8] sm:$0xff]
    %v133 = vld [vmem:[#allocation10] sm:$0xff]
    %v134 = vld [vmem:[#allocation10 + $0x8] sm:$0xff]
    %v135 = vld [vmem:[#allocation10 + $0x10] sm:$0xff]
    %v136 = vld [vmem:[#allocation10 + $0x18] sm:$0xff]
    %vm137 = vcmask 261120
    %v139 = vsel %vm137, %v127, 0
    %v142 = vsel %vm137, %v128, 0
    %144 = vmatprep.subr.mxu0 0.0
    %145 = vmatpush1.msra.mxu0 0.0
    %146 = vmatprep.subr.mxu0 0.0
    %147 = vmatpush1.msra.mxu0 0.0
    %148 = vmatprep.subr.mxu0 0.0
    %149 = vmatpush1.msra.mxu0 0.0
    %150 = vmatprep.subr.mxu0 0.0
    %151 = vmatpush1.msra.mxu0 0.0
    %152 = vmatprep.subr.mxu0 0.0
    %153 = vmatpush1.msra.mxu0 0.0
    %154 = vmatprep.subr.mxu0 0.0
    %155 = vmatpush1.msra.mxu0 0.0
    %156 = vmatprep.subr.mxu0 0.0
    %157 = vmatpush1.msra.mxu0 0.0
    %158 = vmatprep.subr.mxu0 0.0
    %159 = vmatpush1.msra.mxu0 0.0
    %160 = vmatprep.subr.mxu0 0.0
    %161 = vmatpush1.msra.mxu0 0.0
    %162 = vmatprep.subr.mxu0 0.0
    %163 = vmatpush1.msra.mxu0 0.0
    %164 = vmatprep.subr.mxu0 0.0
    %165 = vmatpush1.msra.mxu0 0.0
    %166 = vmatprep.subr.mxu0 0.0
    %167 = vmatpush1.msra.mxu0 0.0
    %168 = vmatprep.subr.mxu0 0.0
    %169 = vmatpush1.msra.mxu0 %v136
    %170 = vmatprep.subr.mxu0 0.0
    %171 = vmatpush1.msra.mxu0 %v135
    %172 = vmatprep.subr.mxu0 0.0
    %173 = vmatpush1.msra.mxu0 %v134
    %174 = vmatprep.subr.mxu0 0.0
    %175 = vmatpush1.msra.mxu0 %v133
    %176 = vmatprep.subr.mxu0 0.0
    %177 = vmatpush2.msra.mxu0 0.0
    %178 = vmatprep.subr.mxu0 0.0
    %179 = vmatpush2.msra.mxu0 0.0
    %180 = vmatprep.subr.mxu0 0.0
    %181 = vmatpush2.msra.mxu0 0.0
    %182 = vmatprep.subr.mxu0 0.0
    %183 = vmatpush2.msra.mxu0 0.0
    %184 = vmatprep.subr.mxu0 0.0
    %185 = vmatpush2.msra.mxu0 0.0
    %186 = vmatprep.subr.mxu0 0.0
    %187 = vmatpush2.msra.mxu0 0.0
    %188 = vmatprep.subr.mxu0 0.0
    %189 = vmatpush2.msra.mxu0 0.0
    %190 = vmatprep.subr.mxu0 0.0
    %191 = vmatpush2.msra.mxu0 0.0
    %192 = vmatprep.subr.mxu0 0.0
    %193 = vmatpush2.msra.mxu0 0.0
    %194 = vmatprep.subr.mxu0 0.0
    %195 = vmatpush2.msra.mxu0 0.0
    %196 = vmatprep.subr.mxu0 0.0
    %197 = vmatpush2.msra.mxu0 0.0
    %198 = vmatprep.subr.mxu0 0.0
    %199 = vmatpush2.msra.mxu0 0.0
    %200 = vmatprep.subr.mxu0 0.0
    %201 = vmatpush2.msra.mxu0 0.0
    %202 = vmatprep.subr.mxu0 0.0
    %203 = vmatpush2.msra.mxu0 0.0
    %204 = vmatprep.subr.mxu0 0.0
    %205 = vmatpush2.msra.mxu0 0.0
    %206 = vmatprep.subr.mxu0 0.0
    %207 = vmatpush2.msra.mxu0 0.0
    %208 = vmatprep.mubr.f32.mxu0 0.0
    %209 = vmatmul.mubr.f32.gmra.mxu0 %v139
    %v210 = vpop.f32.mrf.mxu0
    %v211 = vadd.f32 0.0, %v210
    %v212 = vpop.f32.mrf.mxu0
    %213 = vmatprep.mubr.f32.mxu0 0.0
    %214 = vmatmul.mubr.f32.gmra.mxu0 %v142
    %v215 = vpop.f32.mrf.mxu0
    %v216 = vadd.f32 0.0, %v215
    %v217 = vpop.f32.mrf.mxu0
    %218 = vdwg.mxu0
    %v219 = vmul.f32 %v211, 0.35355338
    %v220 = vmul.f32 %v216, 0.35355338
    %v221 = vld [vmem:[#allocation12] sm:$0xff]
    %v222 = vld [vmem:[#allocation12 + $0x8] sm:$0xff]
    %v223 = vld [vmem:[#allocation12 + $0x10] sm:$0xff]
    %v224 = vld [vmem:[#allocation12 + $0x18] sm:$0xff]
    %v226 = vsel %vm137, %v129, 0
    %v229 = vsel %vm137, %v130, 0
    %231 = vmatprep.subr.mxu0 0.0
    %232 = vmatpush1.msra.mxu0 0.0
    %233 = vmatprep.subr.mxu0 0.0
    %234 = vmatpush1.msra.mxu0 0.0
    %235 = vmatprep.subr.mxu0 0.0
    %236 = vmatpush1.msra.mxu0 0.0
    %237 = vmatprep.subr.mxu0 0.0
    %238 = vmatpush1.msra.mxu0 0.0
    %239 = vmatprep.subr.mxu0 0.0
    %240 = vmatpush1.msra.mxu0 0.0
    %241 = vmatprep.subr.mxu0 0.0
    %242 = vmatpush1.msra.mxu0 0.0
    %243 = vmatprep.subr.mxu0 0.0
    %244 = vmatpush1.msra.mxu0 0.0
    %245 = vmatprep.subr.mxu0 0.0
    %246 = vmatpush1.msra.mxu0 0.0
    %247 = vmatprep.subr.mxu0 0.0
    %248 = vmatpush1.msra.mxu0 0.0
    %249 = vmatprep.subr.mxu0 0.0
    %250 = vmatpush1.msra.mxu0 0.0
    %251 = vmatprep.subr.mxu0 0.0
    %252 = vmatpush1.msra.mxu0 0.0
    %253 = vmatprep.subr.mxu0 0.0
    %254 = vmatpush1.msra.mxu0 0.0
    %255 = vmatprep.subr.mxu0 0.0
    %256 = vmatpush1.msra.mxu0 %v224
    %257 = vmatprep.subr.mxu0 0.0
    %258 = vmatpush1.msra.mxu0 %v223
    %259 = vmatprep.subr.mxu0 0.0
    %260 = vmatpush1.msra.mxu0 %v222
    %261 = vmatprep.subr.mxu0 0.0
    %262 = vmatpush1.msra.mxu0 %v221
    %263 = vmatprep.subr.mxu0 0.0
    %264 = vmatpush2.msra.mxu0 0.0
    %265 = vmatprep.subr.mxu0 0.0
    %266 = vmatpush2.msra.mxu0 0.0
    %267 = vmatprep.subr.mxu0 0.0
    %268 = vmatpush2.msra.mxu0 0.0
    %269 = vmatprep.subr.mxu0 0.0
    %270 = vmatpush2.msra.mxu0 0.0
    %271 = vmatprep.subr.mxu0 0.0
    %272 = vmatpush2.msra.mxu0 0.0
    %273 = vmatprep.subr.mxu0 0.0
    %274 = vmatpush2.msra.mxu0 0.0
    %275 = vmatprep.subr.mxu0 0.0
    %276 = vmatpush2.msra.mxu0 0.0
    %277 = vmatprep.subr.mxu0 0.0
    %278 = vmatpush2.msra.mxu0 0.0
    %279 = vmatprep.subr.mxu0 0.0
    %280 = vmatpush2.msra.mxu0 0.0
    %281 = vmatprep.subr.mxu0 0.0
    %282 = vmatpush2.msra.mxu0 0.0
    %283 = vmatprep.subr.mxu0 0.0
    %284 = vmatpush2.msra.mxu0 0.0
    %285 = vmatprep.subr.mxu0 0.0
    %286 = vmatpush2.msra.mxu0 0.0
    %287 = vmatprep.subr.mxu0 0.0
    %288 = vmatpush2.msra.mxu0 0.0
    %289 = vmatprep.subr.mxu0 0.0
    %290 = vmatpush2.msra.mxu0 0.0
    %291 = vmatprep.subr.mxu0 0.0
    %292 = vmatpush2.msra.mxu0 0.0
    %293 = vmatprep.subr.mxu0 0.0
    %294 = vmatpush2.msra.mxu0 0.0
    %295 = vmatprep.mubr.f32.mxu0 0.0
    %296 = vmatmul.mubr.f32.gmra.mxu0 %v226
    %v297 = vpop.f32.mrf.mxu0
    %v298 = vadd.f32 0.0, %v297
    %v299 = vpop.f32.mrf.mxu0
    %300 = vmatprep.mubr.f32.mxu0 0.0
    %301 = vmatmul.mubr.f32.gmra.mxu0 %v229
    %v302 = vpop.f32.mrf.mxu0
    %v303 = vadd.f32 0.0, %v302
    %v304 = vpop.f32.mrf.mxu0
    %305 = vdwg.mxu0
    %v306 = vld [vmem:[#allocation13] sm:$0xff]
    %v307 = vld [vmem:[#allocation13 + $0x8] sm:$0xff]
    %v308 = vld [vmem:[#allocation13 + $0x10] sm:$0xff]
    %v309 = vld [vmem:[#allocation13 + $0x18] sm:$0xff]
    %v311 = vsel %vm137, %v131, 0
    %v314 = vsel %vm137, %v132, 0
    %316 = vmatprep.subr.mxu0 0.0
    %317 = vmatpush1.msra.mxu0 0.0
    %318 = vmatprep.subr.mxu0 0.0
    %319 = vmatpush1.msra.mxu0 0.0
    %320 = vmatprep.subr.mxu0 0.0
    %321 = vmatpush1.msra.mxu0 0.0
    %322 = vmatprep.subr.mxu0 0.0
    %323 = vmatpush1.msra.mxu0 0.0
    %324 = vmatprep.subr.mxu0 0.0
    %325 = vmatpush1.msra.mxu0 0.0
    %326 = vmatprep.subr.mxu0 0.0
    %327 = vmatpush1.msra.mxu0 0.0
    %328 = vmatprep.subr.mxu0 0.0
    %329 = vmatpush1.msra.mxu0 0.0
    %330 = vmatprep.subr.mxu0 0.0
    %331 = vmatpush1.msra.mxu0 0.0
    %332 = vmatprep.subr.mxu0 0.0
    %333 = vmatpush1.msra.mxu0 0.0
    %334 = vmatprep.subr.mxu0 0.0
    %335 = vmatpush1.msra.mxu0 0.0
    %336 = vmatprep.subr.mxu0 0.0
    %337 = vmatpush1.msra.mxu0 0.0
    %338 = vmatprep.subr.mxu0 0.0
    %339 = vmatpush1.msra.mxu0 0.0
    %340 = vmatprep.subr.mxu0 0.0
    %341 = vmatpush1.msra.mxu0 %v309
    %342 = vmatprep.subr.mxu0 0.0
    %343 = vmatpush1.msra.mxu0 %v308
    %344 = vmatprep.subr.mxu0 0.0
    %345 = vmatpush1.msra.mxu0 %v307
    %346 = vmatprep.subr.mxu0 0.0
    %347 = vmatpush1.msra.mxu0 %v306
    %348 = vmatprep.subr.mxu0 0.0
    %349 = vmatpush2.msra.mxu0 0.0
    %350 = vmatprep.subr.mxu0 0.0
    %351 = vmatpush2.msra.mxu0 0.0
    %352 = vmatprep.subr.mxu0 0.0
    %353 = vmatpush2.msra.mxu0 0.0
    %354 = vmatprep.subr.mxu0 0.0
    %355 = vmatpush2.msra.mxu0 0.0
    %356 = vmatprep.subr.mxu0 0.0
    %357 = vmatpush2.msra.mxu0 0.0
    %358 = vmatprep.subr.mxu0 0.0
    %359 = vmatpush2.msra.mxu0 0.0
    %360 = vmatprep.subr.mxu0 0.0
    %361 = vmatpush2.msra.mxu0 0.0
    %362 = vmatprep.subr.mxu0 0.0
    %363 = vmatpush2.msra.mxu0 0.0
    %364 = vmatprep.subr.mxu0 0.0
    %365 = vmatpush2.msra.mxu0 0.0
    %366 = vmatprep.subr.mxu0 0.0
    %367 = vmatpush2.msra.mxu0 0.0
    %368 = vmatprep.subr.mxu0 0.0
    %369 = vmatpush2.msra.mxu0 0.0
    %370 = vmatprep.subr.mxu0 0.0
    %371 = vmatpush2.msra.mxu0 0.0
    %372 = vmatprep.subr.mxu0 0.0
    %373 = vmatpush2.msra.mxu0 0.0
    %374 = vmatprep.subr.mxu0 0.0
    %375 = vmatpush2.msra.mxu0 0.0
    %376 = vmatprep.subr.mxu0 0.0
    %377 = vmatpush2.msra.mxu0 0.0
    %378 = vmatprep.subr.mxu0 0.0
    %379 = vmatpush2.msra.mxu0 0.0
    %380 = vmatprep.mubr.f32.mxu0 0.0
    %381 = vmatmul.mubr.f32.gmra.mxu0 %v311
    %v382 = vpop.f32.mrf.mxu0
    %v383 = vadd.f32 0.0, %v382
    %v384 = vpop.f32.mrf.mxu0
    %385 = vmatprep.mubr.f32.mxu0 0.0
    %386 = vmatmul.mubr.f32.gmra.mxu0 %v314
    %v387 = vpop.f32.mrf.mxu0
    %v388 = vadd.f32 0.0, %v387
    %v389 = vpop.f32.mrf.mxu0
    %390 = vdwg.mxu0
    %s391 = smul.u32 0, 2
    %v392 = vlaneseq
    %v393 = vand.u32 %v392, 127
    %s394 = sld [smem:[#allocation3 + %s391]]
    %v395 = vstv %s394
    %vm396 = vcmp.lt.s32.totalorder %v393, %v395
    %s397 = sadd.s32 %s391, 1
    %s398 = sld [smem:[#allocation3 + %s397]]
    %v399 = vstv %s398
    %vm400 = vcmp.lt.s32.totalorder %v393, %v399
    %vm401 = vcmask 64512
    %v403 = vsel %vm401, %v219, 0
    %v406 = vsel %vm401, %v298, 0
    %408 = vmatprep.subr.mxu0 0.0
    %409 = vmatpush1.xpose.msra.mxu0 0.0
    %410 = vmatprep.subr.mxu0 0.0
    %411 = vmatpush1.xpose.msra.mxu0 0.0
    %412 = vmatprep.subr.mxu0 0.0
    %413 = vmatpush1.xpose.msra.mxu0 0.0
    %414 = vmatprep.subr.mxu0 0.0
    %415 = vmatpush1.xpose.msra.mxu0 0.0
    %416 = vmatprep.subr.mxu0 0.0
    %417 = vmatpush1.xpose.msra.mxu0 0.0
    %418 = vmatprep.subr.mxu0 0.0
    %419 = vmatpush1.xpose.msra.mxu0 0.0
    %420 = vmatprep.subr.mxu0 0.0
    %421 = vmatpush1.xpose.msra.mxu0 0.0
    %422 = vmatprep.subr.mxu0 0.0
    %423 = vmatpush1.xpose.msra.mxu0 0.0
    %424 = vmatprep.subr.mxu0 0.0
    %425 = vmatpush1.xpose.msra.mxu0 0.0
    %426 = vmatprep.subr.mxu0 0.0
    %427 = vmatpush1.xpose.msra.mxu0 0.0
    %428 = vmatprep.subr.mxu0 0.0
    %429 = vmatpush1.xpose.msra.mxu0 0.0
    %430 = vmatprep.subr.mxu0 0.0
    %431 = vmatpush1.xpose.msra.mxu0 0.0
    %432 = vmatprep.subr.mxu0 0.0
    %433 = vmatpush1.xpose.msra.mxu0 0.0
    %434 = vmatprep.subr.mxu0 0.0
    %435 = vmatpush1.xpose.msra.mxu0 0.0
    %436 = vmatprep.subr.mxu0 0.0
    %437 = vmatpush1.xpose.msra.mxu0 0.0
    %438 = vmatprep.subr.mxu0 0.0
    %439 = vmatpush1.xpose.msra.mxu0 %v406
    %440 = vmatprep.subr.mxu0 0.0
    %441 = vmatpush2.xpose.msra.mxu0 0.0
    %442 = vmatprep.subr.mxu0 0.0
    %443 = vmatpush2.xpose.msra.mxu0 0.0
    %444 = vmatprep.subr.mxu0 0.0
    %445 = vmatpush2.xpose.msra.mxu0 0.0
    %446 = vmatprep.subr.mxu0 0.0
    %447 = vmatpush2.xpose.msra.mxu0 0.0
    %448 = vmatprep.subr.mxu0 0.0
    %449 = vmatpush2.xpose.msra.mxu0 0.0
    %450 = vmatprep.subr.mxu0 0.0
    %451 = vmatpush2.xpose.msra.mxu0 0.0
    %452 = vmatprep.subr.mxu0 0.0
    %453 = vmatpush2.xpose.msra.mxu0 0.0
    %454 = vmatprep.subr.mxu0 0.0
    %455 = vmatpush2.xpose.msra.mxu0 0.0
    %456 = vmatprep.subr.mxu0 0.0
    %457 = vmatpush2.xpose.msra.mxu0 0.0
    %458 = vmatprep.subr.mxu0 0.0
    %459 = vmatpush2.xpose.msra.mxu0 0.0
    %460 = vmatprep.subr.mxu0 0.0
    %461 = vmatpush2.xpose.msra.mxu0 0.0
    %462 = vmatprep.subr.mxu0 0.0
    %463 = vmatpush2.xpose.msra.mxu0 0.0
    %464 = vmatprep.subr.mxu0 0.0
    %465 = vmatpush2.xpose.msra.mxu0 0.0
    %466 = vmatprep.subr.mxu0 0.0
    %467 = vmatpush2.xpose.msra.mxu0 0.0
    %468 = vmatprep.subr.mxu0 0.0
    %469 = vmatpush2.xpose.msra.mxu0 0.0
    %470 = vmatprep.subr.mxu0 0.0
    %471 = vmatpush2.xpose.msra.mxu0 0.0
    %472 = vmatprep.mubr.f32.mxu0 0.0
    %473 = vmatmul.mubr.f32.gmra.mxu0 %v403
    %v474 = vpop.f32.mrf.mxu0
    %v475 = vadd.f32 0.0, %v474
    %v476 = vpop.f32.mrf.mxu0
    %477 = vdwg.mxu0
    %v479 = vsel %vm401, %v220, 0
    %v482 = vsel %vm401, %v303, 0
    %484 = vmatprep.subr.mxu0 0.0
    %485 = vmatpush1.xpose.msra.mxu0 0.0
    %486 = vmatprep.subr.mxu0 0.0
    %487 = vmatpush1.xpose.msra.mxu0 0.0
    %488 = vmatprep.subr.mxu0 0.0
    %489 = vmatpush1.xpose.msra.mxu0 0.0
    %490 = vmatprep.subr.mxu0 0.0
    %491 = vmatpush1.xpose.msra.mxu0 0.0
    %492 = vmatprep.subr.mxu0 0.0
    %493 = vmatpush1.xpose.msra.mxu0 0.0
    %494 = vmatprep.subr.mxu0 0.0
    %495 = vmatpush1.xpose.msra.mxu0 0.0
    %496 = vmatprep.subr.mxu0 0.0
    %497 = vmatpush1.xpose.msra.mxu0 0.0
    %498 = vmatprep.subr.mxu0 0.0
    %499 = vmatpush1.xpose.msra.mxu0 0.0
    %500 = vmatprep.subr.mxu0 0.0
    %501 = vmatpush1.xpose.msra.mxu0 0.0
    %502 = vmatprep.subr.mxu0 0.0
    %503 = vmatpush1.xpose.msra.mxu0 0.0
    %504 = vmatprep.subr.mxu0 0.0
    %505 = vmatpush1.xpose.msra.mxu0 0.0
    %506 = vmatprep.subr.mxu0 0.0
    %507 = vmatpush1.xpose.msra.mxu0 0.0
    %508 = vmatprep.subr.mxu0 0.0
    %509 = vmatpush1.xpose.msra.mxu0 0.0
    %510 = vmatprep.subr.mxu0 0.0
    %511 = vmatpush1.xpose.msra.mxu0 0.0
    %512 = vmatprep.subr.mxu0 0.0
    %513 = vmatpush1.xpose.msra.mxu0 0.0
    %514 = vmatprep.subr.mxu0 0.0
    %515 = vmatpush1.xpose.msra.mxu0 %v482
    %516 = vmatprep.subr.mxu0 0.0
    %517 = vmatpush2.xpose.msra.mxu0 0.0
    %518 = vmatprep.subr.mxu0 0.0
    %519 = vmatpush2.xpose.msra.mxu0 0.0
    %520 = vmatprep.subr.mxu0 0.0
    %521 = vmatpush2.xpose.msra.mxu0 0.0
    %522 = vmatprep.subr.mxu0 0.0
    %523 = vmatpush2.xpose.msra.mxu0 0.0
    %524 = vmatprep.subr.mxu0 0.0
    %525 = vmatpush2.xpose.msra.mxu0 0.0
    %526 = vmatprep.subr.mxu0 0.0
    %527 = vmatpush2.xpose.msra.mxu0 0.0
    %528 = vmatprep.subr.mxu0 0.0
    %529 = vmatpush2.xpose.msra.mxu0 0.0
    %530 = vmatprep.subr.mxu0 0.0
    %531 = vmatpush2.xpose.msra.mxu0 0.0
    %532 = vmatprep.subr.mxu0 0.0
    %533 = vmatpush2.xpose.msra.mxu0 0.0
    %534 = vmatprep.subr.mxu0 0.0
    %535 = vmatpush2.xpose.msra.mxu0 0.0
    %536 = vmatprep.subr.mxu0 0.0
    %537 = vmatpush2.xpose.msra.mxu0 0.0
    %538 = vmatprep.subr.mxu0 0.0
    %539 = vmatpush2.xpose.msra.mxu0 0.0
    %540 = vmatprep.subr.mxu0 0.0
    %541 = vmatpush2.xpose.msra.mxu0 0.0
    %542 = vmatprep.subr.mxu0 0.0
    %543 = vmatpush2.xpose.msra.mxu0 0.0
    %544 = vmatprep.subr.mxu0 0.0
    %545 = vmatpush2.xpose.msra.mxu0 0.0
    %546 = vmatprep.subr.mxu0 0.0
    %547 = vmatpush2.xpose.msra.mxu0 0.0
    %548 = vmatprep.mubr.f32.mxu0 0.0
    %549 = vmatmul.mubr.f32.gmra.mxu0 %v479
    %v550 = vpop.f32.mrf.mxu0
    %v551 = vadd.f32 0.0, %v550
    %v552 = vpop.f32.mrf.mxu0
    %553 = vdwg.mxu0
    %v554 = vsel %vm396, 1, 0
    %v555 = vsel %vm400, 1, 0
    %v556 = vlaneseq
    %v557 = vshrl.u32 %v556, 7
    %v558 = vsub.s32 0, %v557
    %v559 = vrot.slane %v554, %v558
    %v560 = vlaneseq
    %v561 = vshrl.u32 %v560, 7
    %v562 = vsub.s32 0, %v561
    %v563 = vrot.slane %v555, %v562
    %vm564 = vcmp.eq.s32.totalorder %v559, 1
    %vm565 = vcmp.eq.s32.totalorder %v563, 1
    %v566 = vsel %vm564, %v475, -1000000.0
    %v567 = vsel %vm565, %v551, -1000000.0
    %v568 = vsel %vm401, %v566, -inf
    %569 = vmax.xlane.f32.xlu0 %v568
    %v570 = vpop.xlane.xlu0 %569
    %v571 = vsel %vm401, %v567, -inf
    %572 = vmax.xlane.f32.xlu0 %v571
    %v573 = vpop.xlane.xlu0 %572
    %v574 = vsub.f32 %v566, %v570
    %v575 = vsub.f32 %v567, %v573
    %v576 = vmul.f32 %v574, 1.442695
    %v577 = vpow.pop %v576
    %v578 = vmul.f32 %v575, 1.442695
    %v579 = vpow.pop %v578
    %v580 = vsel %vm401, %v577, 0.0
    %581 = vadd.xlane.f32.xlu0 %v580
    %v582 = vpop.xlane.xlu0 %581
    %v583 = vsel %vm401, %v579, 0.0
    %584 = vadd.xlane.f32.xlu0 %v583
    %v585 = vpop.xlane.xlu0 %584
    %v586 = vrcp.pop %v582
    %v587 = vrcp.pop %v585
    %v588 = vmul.f32 %v577, %v586
    %v589 = vmul.f32 %v579, %v587
    %v591 = vsel %vm401, %v588, 0
    %593 = vmatprep.subr.mxu0 0.0
    %594 = vmatpush1.msra.mxu0 0.0
    %595 = vmatprep.subr.mxu0 0.0
    %596 = vmatpush1.msra.mxu0 0.0
    %597 = vmatprep.subr.mxu0 0.0
    %598 = vmatpush1.msra.mxu0 0.0
    %599 = vmatprep.subr.mxu0 0.0
    %600 = vmatpush1.msra.mxu0 0.0
    %601 = vmatprep.subr.mxu0 0.0
    %602 = vmatpush1.msra.mxu0 0.0
    %603 = vmatprep.subr.mxu0 0.0
    %604 = vmatpush1.msra.mxu0 0.0
    %605 = vmatprep.subr.mxu0 0.0
    %606 = vmatpush1.msra.mxu0 0.0
    %607 = vmatprep.subr.mxu0 0.0
    %608 = vmatpush1.msra.mxu0 0.0
    %609 = vmatprep.subr.mxu0 0.0
    %610 = vmatpush1.msra.mxu0 0.0
    %611 = vmatprep.subr.mxu0 0.0
    %612 = vmatpush1.msra.mxu0 0.0
    %613 = vmatprep.subr.mxu0 0.0
    %614 = vmatpush1.msra.mxu0 0.0
    %615 = vmatprep.subr.mxu0 0.0
    %616 = vmatpush1.msra.mxu0 0.0
    %617 = vmatprep.subr.mxu0 0.0
    %618 = vmatpush1.msra.mxu0 0.0
    %619 = vmatprep.subr.mxu0 0.0
    %620 = vmatpush1.msra.mxu0 0.0
    %621 = vmatprep.subr.mxu0 0.0
    %622 = vmatpush1.msra.mxu0 0.0
    %623 = vmatprep.subr.mxu0 0.0
    %624 = vmatpush1.msra.mxu0 %v383
    %625 = vmatprep.subr.mxu0 0.0
    %626 = vmatpush2.msra.mxu0 0.0
    %627 = vmatprep.subr.mxu0 0.0
    %628 = vmatpush2.msra.mxu0 0.0
    %629 = vmatprep.subr.mxu0 0.0
    %630 = vmatpush2.msra.mxu0 0.0
    %631 = vmatprep.subr.mxu0 0.0
    %632 = vmatpush2.msra.mxu0 0.0
    %633 = vmatprep.subr.mxu0 0.0
    %634 = vmatpush2.msra.mxu0 0.0
    %635 = vmatprep.subr.mxu0 0.0
    %636 = vmatpush2.msra.mxu0 0.0
    %637 = vmatprep.subr.mxu0 0.0
    %638 = vmatpush2.msra.mxu0 0.0
    %639 = vmatprep.subr.mxu0 0.0
    %640 = vmatpush2.msra.mxu0 0.0
    %641 = vmatprep.subr.mxu0 0.0
    %642 = vmatpush2.msra.mxu0 0.0
    %643 = vmatprep.subr.mxu0 0.0
    %644 = vmatpush2.msra.mxu0 0.0
    %645 = vmatprep.subr.mxu0 0.0
    %646 = vmatpush2.msra.mxu0 0.0
    %647 = vmatprep.subr.mxu0 0.0
    %648 = vmatpush2.msra.mxu0 0.0
    %649 = vmatprep.subr.mxu0 0.0
    %650 = vmatpush2.msra.mxu0 0.0
    %651 = vmatprep.subr.mxu0 0.0
    %652 = vmatpush2.msra.mxu0 0.0
    %653 = vmatprep.subr.mxu0 0.0
    %654 = vmatpush2.msra.mxu0 0.0
    %655 = vmatprep.subr.mxu0 0.0
    %656 = vmatpush2.msra.mxu0 0.0
    %657 = vmatprep.mubr.f32.mxu0 0.0
    %658 = vmatmul.mubr.f32.gmra.mxu0 %v591
    %v659 = vpop.f32.mrf.mxu0
    %v660 = vadd.f32 0.0, %v659
    %v661 = vpop.f32.mrf.mxu0
    %662 = vdwg.mxu0
    %v664 = vsel %vm401, %v589, 0
    %666 = vmatprep.subr.mxu0 0.0
    %667 = vmatpush1.msra.mxu0 0.0
    %668 = vmatprep.subr.mxu0 0.0
    %669 = vmatpush1.msra.mxu0 0.0
    %670 = vmatprep.subr.mxu0 0.0
    %671 = vmatpush1.msra.mxu0 0.0
    %672 = vmatprep.subr.mxu0 0.0
    %673 = vmatpush1.msra.mxu0 0.0
    %674 = vmatprep.subr.mxu0 0.0
    %675 = vmatpush1.msra.mxu0 0.0
    %676 = vmatprep.subr.mxu0 0.0
    %677 = vmatpush1.msra.mxu0 0.0
    %678 = vmatprep.subr.mxu0 0.0
    %679 = vmatpush1.msra.mxu0 0.0
    %680 = vmatprep.subr.mxu0 0.0
    %681 = vmatpush1.msra.mxu0 0.0
    %682 = vmatprep.subr.mxu0 0.0
    %683 = vmatpush1.msra.mxu0 0.0
    %684 = vmatprep.subr.mxu0 0.0
    %685 = vmatpush1.msra.mxu0 0.0
    %686 = vmatprep.subr.mxu0 0.0
    %687 = vmatpush1.msra.mxu0 0.0
    %688 = vmatprep.subr.mxu0 0.0
    %689 = vmatpush1.msra.mxu0 0.0
    %690 = vmatprep.subr.mxu0 0.0
    %691 = vmatpush1.msra.mxu0 0.0
    %692 = vmatprep.subr.mxu0 0.0
    %693 = vmatpush1.msra.mxu0 0.0
    %694 = vmatprep.subr.mxu0 0.0
    %695 = vmatpush1.msra.mxu0 0.0
    %696 = vmatprep.subr.mxu0 0.0
    %697 = vmatpush1.msra.mxu0 %v388
    %698 = vmatprep.subr.mxu0 0.0
    %699 = vmatpush2.msra.mxu0 0.0
    %700 = vmatprep.subr.mxu0 0.0
    %701 = vmatpush2.msra.mxu0 0.0
    %702 = vmatprep.subr.mxu0 0.0
    %703 = vmatpush2.msra.mxu0 0.0
    %704 = vmatprep.subr.mxu0 0.0
    %705 = vmatpush2.msra.mxu0 0.0
    %706 = vmatprep.subr.mxu0 0.0
    %707 = vmatpush2.msra.mxu0 0.0
    %708 = vmatprep.subr.mxu0 0.0
    %709 = vmatpush2.msra.mxu0 0.0
    %710 = vmatprep.subr.mxu0 0.0
    %711 = vmatpush2.msra.mxu0 0.0
    %712 = vmatprep.subr.mxu0 0.0
    %713 = vmatpush2.msra.mxu0 0.0
    %714 = vmatprep.subr.mxu0 0.0
    %715 = vmatpush2.msra.mxu0 0.0
    %716 = vmatprep.subr.mxu0 0.0
    %717 = vmatpush2.msra.mxu0 0.0
    %718 = vmatprep.subr.mxu0 0.0
    %719 = vmatpush2.msra.mxu0 0.0
    %720 = vmatprep.subr.mxu0 0.0
    %721 = vmatpush2.msra.mxu0 0.0
    %722 = vmatprep.subr.mxu0 0.0
    %723 = vmatpush2.msra.mxu0 0.0
    %724 = vmatprep.subr.mxu0 0.0
    %725 = vmatpush2.msra.mxu0 0.0
    %726 = vmatprep.subr.mxu0 0.0
    %727 = vmatpush2.msra.mxu0 0.0
    %728 = vmatprep.subr.mxu0 0.0
    %729 = vmatpush2.msra.mxu0 0.0
    %730 = vmatprep.mubr.f32.mxu0 0.0
    %731 = vmatmul.mubr.f32.gmra.mxu0 %v664
    %v732 = vpop.f32.mrf.mxu0
    %v733 = vadd.f32 0.0, %v732
    %v734 = vpop.f32.mrf.mxu0
    %735 = vdwg.mxu0
    %736 = vrot.lane.b32.xlu0 %v219, 120
    %v737 = vpop.permute.xlu0 %736
    %738 = vrot.lane.b32.xlu0 %v298, 120
    %v739 = vpop.permute.xlu0 %738
    %v740 = vsel %vm401, %v737, 0
    %v742 = vsel %vm401, %v739, 0
    %744 = vmatprep.subr.mxu0 0.0
    %745 = vmatpush1.xpose.msra.mxu0 0.0
    %746 = vmatprep.subr.mxu0 0.0
    %747 = vmatpush1.xpose.msra.mxu0 0.0
    %748 = vmatprep.subr.mxu0 0.0
    %749 = vmatpush1.xpose.msra.mxu0 0.0
    %750 = vmatprep.subr.mxu0 0.0
    %751 = vmatpush1.xpose.msra.mxu0 0.0
    %752 = vmatprep.subr.mxu0 0.0
    %753 = vmatpush1.xpose.msra.mxu0 0.0
    %754 = vmatprep.subr.mxu0 0.0
    %755 = vmatpush1.xpose.msra.mxu0 0.0
    %756 = vmatprep.subr.mxu0 0.0
    %757 = vmatpush1.xpose.msra.mxu0 0.0
    %758 = vmatprep.subr.mxu0 0.0
    %759 = vmatpush1.xpose.msra.mxu0 0.0
    %760 = vmatprep.subr.mxu0 0.0
    %761 = vmatpush1.xpose.msra.mxu0 0.0
    %762 = vmatprep.subr.mxu0 0.0
    %763 = vmatpush1.xpose.msra.mxu0 0.0
    %764 = vmatprep.subr.mxu0 0.0
    %765 = vmatpush1.xpose.msra.mxu0 0.0
    %766 = vmatprep.subr.mxu0 0.0
    %767 = vmatpush1.xpose.msra.mxu0 0.0
    %768 = vmatprep.subr.mxu0 0.0
    %769 = vmatpush1.xpose.msra.mxu0 0.0
    %770 = vmatprep.subr.mxu0 0.0
    %771 = vmatpush1.xpose.msra.mxu0 0.0
    %772 = vmatprep.subr.mxu0 0.0
    %773 = vmatpush1.xpose.msra.mxu0 0.0
    %774 = vmatprep.subr.mxu0 0.0
    %775 = vmatpush1.xpose.msra.mxu0 %v742
    %776 = vmatprep.subr.mxu0 0.0
    %777 = vmatpush2.xpose.msra.mxu0 0.0
    %778 = vmatprep.subr.mxu0 0.0
    %779 = vmatpush2.xpose.msra.mxu0 0.0
    %780 = vmatprep.subr.mxu0 0.0
    %781 = vmatpush2.xpose.msra.mxu0 0.0
    %782 = vmatprep.subr.mxu0 0.0
    %783 = vmatpush2.xpose.msra.mxu0 0.0
    %784 = vmatprep.subr.mxu0 0.0
    %785 = vmatpush2.xpose.msra.mxu0 0.0
    %786 = vmatprep.subr.mxu0 0.0
    %787 = vmatpush2.xpose.msra.mxu0 0.0
    %788 = vmatprep.subr.mxu0 0.0
    %789 = vmatpush2.xpose.msra.mxu0 0.0
    %790 = vmatprep.subr.mxu0 0.0
    %791 = vmatpush2.xpose.msra.mxu0 0.0
    %792 = vmatprep.subr.mxu0 0.0
    %793 = vmatpush2.xpose.msra.mxu0 0.0
    %794 = vmatprep.subr.mxu0 0.0
    %795 = vmatpush2.xpose.msra.mxu0 0.0
    %796 = vmatprep.subr.mxu0 0.0
    %797 = vmatpush2.xpose.msra.mxu0 0.0
    %798 = vmatprep.subr.mxu0 0.0
    %799 = vmatpush2.xpose.msra.mxu0 0.0
    %800 = vmatprep.subr.mxu0 0.0
    %801 = vmatpush2.xpose.msra.mxu0 0.0
    %802 = vmatprep.subr.mxu0 0.0
    %803 = vmatpush2.xpose.msra.mxu0 0.0
    %804 = vmatprep.subr.mxu0 0.0
    %805 = vmatpush2.xpose.msra.mxu0 0.0
    %806 = vmatprep.subr.mxu0 0.0
    %807 = vmatpush2.xpose.msra.mxu0 0.0
    %808 = vmatprep.mubr.f32.mxu0 0.0
    %809 = vmatmul.mubr.f32.gmra.mxu0 %v740
    %v810 = vpop.f32.mrf.mxu0
    %v811 = vadd.f32 0.0, %v810
    %v812 = vpop.f32.mrf.mxu0
    %813 = vdwg.mxu0
    %814 = vrot.lane.b32.xlu0 %v220, 120
    %v815 = vpop.permute.xlu0 %814
    %816 = vrot.lane.b32.xlu0 %v303, 120
    %v817 = vpop.permute.xlu0 %816
    %v818 = vsel %vm401, %v815, 0
    %v820 = vsel %vm401, %v817, 0
    %822 = vmatprep.subr.mxu0 0.0
    %823 = vmatpush1.xpose.msra.mxu0 0.0
    %824 = vmatprep.subr.mxu0 0.0
    %825 = vmatpush1.xpose.msra.mxu0 0.0
    %826 = vmatprep.subr.mxu0 0.0
    %827 = vmatpush1.xpose.msra.mxu0 0.0
    %828 = vmatprep.subr.mxu0 0.0
    %829 = vmatpush1.xpose.msra.mxu0 0.0
    %830 = vmatprep.subr.mxu0 0.0
    %831 = vmatpush1.xpose.msra.mxu0 0.0
    %832 = vmatprep.subr.mxu0 0.0
    %833 = vmatpush1.xpose.msra.mxu0 0.0
    %834 = vmatprep.subr.mxu0 0.0
    %835 = vmatpush1.xpose.msra.mxu0 0.0
    %836 = vmatprep.subr.mxu0 0.0
    %837 = vmatpush1.xpose.msra.mxu0 0.0
    %838 = vmatprep.subr.mxu0 0.0
    %839 = vmatpush1.xpose.msra.mxu0 0.0
    %840 = vmatprep.subr.mxu0 0.0
    %841 = vmatpush1.xpose.msra.mxu0 0.0
    %842 = vmatprep.subr.mxu0 0.0
    %843 = vmatpush1.xpose.msra.mxu0 0.0
    %844 = vmatprep.subr.mxu0 0.0
    %845 = vmatpush1.xpose.msra.mxu0 0.0
    %846 = vmatprep.subr.mxu0 0.0
    %847 = vmatpush1.xpose.msra.mxu0 0.0
    %848 = vmatprep.subr.mxu0 0.0
    %849 = vmatpush1.xpose.msra.mxu0 0.0
    %850 = vmatprep.subr.mxu0 0.0
    %851 = vmatpush1.xpose.msra.mxu0 0.0
    %852 = vmatprep.subr.mxu0 0.0
    %853 = vmatpush1.xpose.msra.mxu0 %v820
    %854 = vmatprep.subr.mxu0 0.0
    %855 = vmatpush2.xpose.msra.mxu0 0.0
    %856 = vmatprep.subr.mxu0 0.0
    %857 = vmatpush2.xpose.msra.mxu0 0.0
    %858 = vmatprep.subr.mxu0 0.0
    %859 = vmatpush2.xpose.msra.mxu0 0.0
    %860 = vmatprep.subr.mxu0 0.0
    %861 = vmatpush2.xpose.msra.mxu0 0.0
    %862 = vmatprep.subr.mxu0 0.0
    %863 = vmatpush2.xpose.msra.mxu0 0.0
    %864 = vmatprep.subr.mxu0 0.0
    %865 = vmatpush2.xpose.msra.mxu0 0.0
    %866 = vmatprep.subr.mxu0 0.0
    %867 = vmatpush2.xpose.msra.mxu0 0.0
    %868 = vmatprep.subr.mxu0 0.0
    %869 = vmatpush2.xpose.msra.mxu0 0.0
    %870 = vmatprep.subr.mxu0 0.0
    %871 = vmatpush2.xpose.msra.mxu0 0.0
    %872 = vmatprep.subr.mxu0 0.0
    %873 = vmatpush2.xpose.msra.mxu0 0.0
    %874 = vmatprep.subr.mxu0 0.0
    %875 = vmatpush2.xpose.msra.mxu0 0.0
    %876 = vmatprep.subr.mxu0 0.0
    %877 = vmatpush2.xpose.msra.mxu0 0.0
    %878 = vmatprep.subr.mxu0 0.0
    %879 = vmatpush2.xpose.msra.mxu0 0.0
    %880 = vmatprep.subr.mxu0 0.0
    %881 = vmatpush2.xpose.msra.mxu0 0.0
    %882 = vmatprep.subr.mxu0 0.0
    %883 = vmatpush2.xpose.msra.mxu0 0.0
    %884 = vmatprep.subr.mxu0 0.0
    %885 = vmatpush2.xpose.msra.mxu0 0.0
    %886 = vmatprep.mubr.f32.mxu0 0.0
    %887 = vmatmul.mubr.f32.gmra.mxu0 %v818
    %v888 = vpop.f32.mrf.mxu0
    %v889 = vadd.f32 0.0, %v888
    %v890 = vpop.f32.mrf.mxu0
    %891 = vdwg.mxu0
    %v892 = vsel %vm564, %v811, -1000000.0
    %v893 = vsel %vm565, %v889, -1000000.0
    %v894 = vsel %vm401, %v892, -inf
    %895 = vmax.xlane.f32.xlu0 %v894
    %v896 = vpop.xlane.xlu0 %895
    %v897 = vsel %vm401, %v893, -inf
    %898 = vmax.xlane.f32.xlu0 %v897
    %v899 = vpop.xlane.xlu0 %898
    %v900 = vsub.f32 %v892, %v896
    %v901 = vsub.f32 %v893, %v899
    %v902 = vmul.f32 %v900, 1.442695
    %v903 = vpow.pop %v902
    %v904 = vmul.f32 %v901, 1.442695
    %v905 = vpow.pop %v904
    %v906 = vsel %vm401, %v903, 0.0
    %907 = vadd.xlane.f32.xlu0 %v906
    %v908 = vpop.xlane.xlu0 %907
    %v909 = vsel %vm401, %v905, 0.0
    %910 = vadd.xlane.f32.xlu0 %v909
    %v911 = vpop.xlane.xlu0 %910
    %v912 = vrcp.pop %v908
    %v913 = vrcp.pop %v911
    %v914 = vmul.f32 %v903, %v912
    %v915 = vmul.f32 %v905, %v913
    %917 = vrot.lane.b32.xlu0 %v383, 120
    %v918 = vpop.permute.xlu0 %917
    %v921 = vsel %vm401, %v914, 0
    %923 = vmatprep.subr.mxu0 0.0
    %924 = vmatpush1.msra.mxu0 0.0
    %925 = vmatprep.subr.mxu0 0.0
    %926 = vmatpush1.msra.mxu0 0.0
    %927 = vmatprep.subr.mxu0 0.0
    %928 = vmatpush1.msra.mxu0 0.0
    %929 = vmatprep.subr.mxu0 0.0
    %930 = vmatpush1.msra.mxu0 0.0
    %931 = vmatprep.subr.mxu0 0.0
    %932 = vmatpush1.msra.mxu0 0.0
    %933 = vmatprep.subr.mxu0 0.0
    %934 = vmatpush1.msra.mxu0 0.0
    %935 = vmatprep.subr.mxu0 0.0
    %936 = vmatpush1.msra.mxu0 0.0
    %937 = vmatprep.subr.mxu0 0.0
    %938 = vmatpush1.msra.mxu0 0.0
    %939 = vmatprep.subr.mxu0 0.0
    %940 = vmatpush1.msra.mxu0 0.0
    %941 = vmatprep.subr.mxu0 0.0
    %942 = vmatpush1.msra.mxu0 0.0
    %943 = vmatprep.subr.mxu0 0.0
    %944 = vmatpush1.msra.mxu0 0.0
    %945 = vmatprep.subr.mxu0 0.0
    %946 = vmatpush1.msra.mxu0 0.0
    %947 = vmatprep.subr.mxu0 0.0
    %948 = vmatpush1.msra.mxu0 0.0
    %949 = vmatprep.subr.mxu0 0.0
    %950 = vmatpush1.msra.mxu0 0.0
    %951 = vmatprep.subr.mxu0 0.0
    %952 = vmatpush1.msra.mxu0 0.0
    %953 = vmatprep.subr.mxu0 0.0
    %954 = vmatpush1.msra.mxu0 %v918
    %955 = vmatprep.subr.mxu0 0.0
    %956 = vmatpush2.msra.mxu0 0.0
    %957 = vmatprep.subr.mxu0 0.0
    %958 = vmatpush2.msra.mxu0 0.0
    %959 = vmatprep.subr.mxu0 0.0
    %960 = vmatpush2.msra.mxu0 0.0
    %961 = vmatprep.subr.mxu0 0.0
    %962 = vmatpush2.msra.mxu0 0.0
    %963 = vmatprep.subr.mxu0 0.0
    %964 = vmatpush2.msra.mxu0 0.0
    %965 = vmatprep.subr.mxu0 0.0
    %966 = vmatpush2.msra.mxu0 0.0
    %967 = vmatprep.subr.mxu0 0.0
    %968 = vmatpush2.msra.mxu0 0.0
    %969 = vmatprep.subr.mxu0 0.0
    %970 = vmatpush2.msra.mxu0 0.0
    %971 = vmatprep.subr.mxu0 0.0
    %972 = vmatpush2.msra.mxu0 0.0
    %973 = vmatprep.subr.mxu0 0.0
    %974 = vmatpush2.msra.mxu0 0.0
    %975 = vmatprep.subr.mxu0 0.0
    %976 = vmatpush2.msra.mxu0 0.0
    %977 = vmatprep.subr.mxu0 0.0
    %978 = vmatpush2.msra.mxu0 0.0
    %979 = vmatprep.subr.mxu0 0.0
    %980 = vmatpush2.msra.mxu0 0.0
    %981 = vmatprep.subr.mxu0 0.0
    %982 = vmatpush2.msra.mxu0 0.0
    %983 = vmatprep.subr.mxu0 0.0
    %984 = vmatpush2.msra.mxu0 0.0
    %985 = vmatprep.subr.mxu0 0.0
    %986 = vmatpush2.msra.mxu0 0.0
    %987 = vmatprep.mubr.f32.mxu0 0.0
    %988 = vmatmul.mubr.f32.gmra.mxu0 %v921
    %v989 = vpop.f32.mrf.mxu0
    %v990 = vadd.f32 0.0, %v989
    %v991 = vpop.f32.mrf.mxu0
    %992 = vdwg.mxu0
    %994 = vrot.lane.b32.xlu0 %v388, 120
    %v995 = vpop.permute.xlu0 %994
    %v998 = vsel %vm401, %v915, 0
    %1000 = vmatprep.subr.mxu0 0.0
    %1001 = vmatpush1.msra.mxu0 0.0
    %1002 = vmatprep.subr.mxu0 0.0
    %1003 = vmatpush1.msra.mxu0 0.0
    %1004 = vmatprep.subr.mxu0 0.0
    %1005 = vmatpush1.msra.mxu0 0.0
    %1006 = vmatprep.subr.mxu0 0.0
    %1007 = vmatpush1.msra.mxu0 0.0
    %1008 = vmatprep.subr.mxu0 0.0
    %1009 = vmatpush1.msra.mxu0 0.0
    %1010 = vmatprep.subr.mxu0 0.0
    %1011 = vmatpush1.msra.mxu0 0.0
    %1012 = vmatprep.subr.mxu0 0.0
    %1013 = vmatpush1.msra.mxu0 0.0
    %1014 = vmatprep.subr.mxu0 0.0
    %1015 = vmatpush1.msra.mxu0 0.0
    %1016 = vmatprep.subr.mxu0 0.0
    %1017 = vmatpush1.msra.mxu0 0.0
    %1018 = vmatprep.subr.mxu0 0.0
    %1019 = vmatpush1.msra.mxu0 0.0
    %1020 = vmatprep.subr.mxu0 0.0
    %1021 = vmatpush1.msra.mxu0 0.0
    %1022 = vmatprep.subr.mxu0 0.0
    %1023 = vmatpush1.msra.mxu0 0.0
    %1024 = vmatprep.subr.mxu0 0.0
    %1025 = vmatpush1.msra.mxu0 0.0
    %1026 = vmatprep.subr.mxu0 0.0
    %1027 = vmatpush1.msra.mxu0 0.0
    %1028 = vmatprep.subr.mxu0 0.0
    %1029 = vmatpush1.msra.mxu0 0.0
    %1030 = vmatprep.subr.mxu0 0.0
    %1031 = vmatpush1.msra.mxu0 %v995
    %1032 = vmatprep.subr.mxu0 0.0
    %1033 = vmatpush2.msra.mxu0 0.0
    %1034 = vmatprep.subr.mxu0 0.0
    %1035 = vmatpush2.msra.mxu0 0.0
    %1036 = vmatprep.subr.mxu0 0.0
    %1037 = vmatpush2.msra.mxu0 0.0
    %1038 = vmatprep.subr.mxu0 0.0
    %1039 = vmatpush2.msra.mxu0 0.0
    %1040 = vmatprep.subr.mxu0 0.0
    %1041 = vmatpush2.msra.mxu0 0.0
    %1042 = vmatprep.subr.mxu0 0.0
    %1043 = vmatpush2.msra.mxu0 0.0
    %1044 = vmatprep.subr.mxu0 0.0
    %1045 = vmatpush2.msra.mxu0 0.0
    %1046 = vmatprep.subr.mxu0 0.0
    %1047 = vmatpush2.msra.mxu0 0.0
    %1048 = vmatprep.subr.mxu0 0.0
    %1049 = vmatpush2.msra.mxu0 0.0
    %1050 = vmatprep.subr.mxu0 0.0
    %1051 = vmatpush2.msra.mxu0 0.0
    %1052 = vmatprep.subr.mxu0 0.0
    %1053 = vmatpush2.msra.mxu0 0.0
    %1054 = vmatprep.subr.mxu0 0.0
    %1055 = vmatpush2.msra.mxu0 0.0
    %1056 = vmatprep.subr.mxu0 0.0
    %1057 = vmatpush2.msra.mxu0 0.0
    %1058 = vmatprep.subr.mxu0 0.0
    %1059 = vmatpush2.msra.mxu0 0.0
    %1060 = vmatprep.subr.mxu0 0.0
    %1061 = vmatpush2.msra.mxu0 0.0
    %1062 = vmatprep.subr.mxu0 0.0
    %1063 = vmatpush2.msra.mxu0 0.0
    %1064 = vmatprep.mubr.f32.mxu0 0.0
    %1065 = vmatmul.mubr.f32.gmra.mxu0 %v998
    %v1066 = vpop.f32.mrf.mxu0
    %v1067 = vadd.f32 0.0, %v1066
    %v1068 = vpop.f32.mrf.mxu0
    %1069 = vdwg.mxu0
    %1070 = vrot.lane.b32.xlu0 %v219, 112
    %v1071 = vpop.permute.xlu0 %1070
    %1072 = vrot.lane.b32.xlu0 %v298, 112
    %v1073 = vpop.permute.xlu0 %1072
    %v1074 = vsel %vm401, %v1071, 0
    %v1076 = vsel %vm401, %v1073, 0
    %1078 = vmatprep.subr.mxu0 0.0
    %1079 = vmatpush1.xpose.msra.mxu0 0.0
    %1080 = vmatprep.subr.mxu0 0.0
    %1081 = vmatpush1.xpose.msra.mxu0 0.0
    %1082 = vmatprep.subr.mxu0 0.0
    %1083 = vmatpush1.xpose.msra.mxu0 0.0
    %1084 = vmatprep.subr.mxu0 0.0
    %1085 = vmatpush1.xpose.msra.mxu0 0.0
    %1086 = vmatprep.subr.mxu0 0.0
    %1087 = vmatpush1.xpose.msra.mxu0 0.0
    %1088 = vmatprep.subr.mxu0 0.0
    %1089 = vmatpush1.xpose.msra.mxu0 0.0
    %1090 = vmatprep.subr.mxu0 0.0
    %1091 = vmatpush1.xpose.msra.mxu0 0.0
    %1092 = vmatprep.subr.mxu0 0.0
    %1093 = vmatpush1.xpose.msra.mxu0 0.0
    %1094 = vmatprep.subr.mxu0 0.0
    %1095 = vmatpush1.xpose.msra.mxu0 0.0
    %1096 = vmatprep.subr.mxu0 0.0
    %1097 = vmatpush1.xpose.msra.mxu0 0.0
    %1098 = vmatprep.subr.mxu0 0.0
    %1099 = vmatpush1.xpose.msra.mxu0 0.0
    %1100 = vmatprep.subr.mxu0 0.0
    %1101 = vmatpush1.xpose.msra.mxu0 0.0
    %1102 = vmatprep.subr.mxu0 0.0
    %1103 = vmatpush1.xpose.msra.mxu0 0.0
    %1104 = vmatprep.subr.mxu0 0.0
    %1105 = vmatpush1.xpose.msra.mxu0 0.0
    %1106 = vmatprep.subr.mxu0 0.0
    %1107 = vmatpush1.xpose.msra.mxu0 0.0
    %1108 = vmatprep.subr.mxu0 0.0
    %1109 = vmatpush1.xpose.msra.mxu0 %v1076
    %1110 = vmatprep.subr.mxu0 0.0
    %1111 = vmatpush2.xpose.msra.mxu0 0.0
    %1112 = vmatprep.subr.mxu0 0.0
    %1113 = vmatpush2.xpose.msra.mxu0 0.0
    %1114 = vmatprep.subr.mxu0 0.0
    %1115 = vmatpush2.xpose.msra.mxu0 0.0
    %1116 = vmatprep.subr.mxu0 0.0
    %1117 = vmatpush2.xpose.msra.mxu0 0.0
    %1118 = vmatprep.subr.mxu0 0.0
    %1119 = vmatpush2.xpose.msra.mxu0 0.0
    %1120 = vmatprep.subr.mxu0 0.0
    %1121 = vmatpush2.xpose.msra.mxu0 0.0
    %1122 = vmatprep.subr.mxu0 0.0
    %1123 = vmatpush2.xpose.msra.mxu0 0.0
    %1124 = vmatprep.subr.mxu0 0.0
    %1125 = vmatpush2.xpose.msra.mxu0 0.0
    %1126 = vmatprep.subr.mxu0 0.0
    %1127 = vmatpush2.xpose.msra.mxu0 0.0
    %1128 = vmatprep.subr.mxu0 0.0
    %1129 = vmatpush2.xpose.msra.mxu0 0.0
    %1130 = vmatprep.subr.mxu0 0.0
    %1131 = vmatpush2.xpose.msra.mxu0 0.0
    %1132 = vmatprep.subr.mxu0 0.0
    %1133 = vmatpush2.xpose.msra.mxu0 0.0
    %1134 = vmatprep.subr.mxu0 0.0
    %1135 = vmatpush2.xpose.msra.mxu0 0.0
    %1136 = vmatprep.subr.mxu0 0.0
    %1137 = vmatpush2.xpose.msra.mxu0 0.0
    %1138 = vmatprep.subr.mxu0 0.0
    %1139 = vmatpush2.xpose.msra.mxu0 0.0
    %1140 = vmatprep.subr.mxu0 0.0
    %1141 = vmatpush2.xpose.msra.mxu0 0.0
    %1142 = vmatprep.mubr.f32.mxu0 0.0
    %1143 = vmatmul.mubr.f32.gmra.mxu0 %v1074
    %v1144 = vpop.f32.mrf.mxu0
    %v1145 = vadd.f32 0.0, %v1144
    %v1146 = vpop.f32.mrf.mxu0
    %1147 = vdwg.mxu0
    %1148 = vrot.lane.b32.xlu0 %v220, 112
    %v1149 = vpop.permute.xlu0 %1148
    %1150 = vrot.lane.b32.xlu0 %v303, 112
    %v1151 = vpop.permute.xlu0 %1150
    %v1152 = vsel %vm401, %v1149, 0
    %v1154 = vsel %vm401, %v1151, 0
    %1156 = vmatprep.subr.mxu0 0.0
    %1157 = vmatpush1.xpose.msra.mxu0 0.0
    %1158 = vmatprep.subr.mxu0 0.0
    %1159 = vmatpush1.xpose.msra.mxu0 0.0
    %1160 = vmatprep.subr.mxu0 0.0
    %1161 = vmatpush1.xpose.msra.mxu0 0.0
    %1162 = vmatprep.subr.mxu0 0.0
    %1163 = vmatpush1.xpose.msra.mxu0 0.0
    %1164 = vmatprep.subr.mxu0 0.0
    %1165 = vmatpush1.xpose.msra.mxu0 0.0
    %1166 = vmatprep.subr.mxu0 0.0
    %1167 = vmatpush1.xpose.msra.mxu0 0.0
    %1168 = vmatprep.subr.mxu0 0.0
    %1169 = vmatpush1.xpose.msra.mxu0 0.0
    %1170 = vmatprep.subr.mxu0 0.0
    %1171 = vmatpush1.xpose.msra.mxu0 0.0
    %1172 = vmatprep.subr.mxu0 0.0
    %1173 = vmatpush1.xpose.msra.mxu0 0.0
    %1174 = vmatprep.subr.mxu0 0.0
    %1175 = vmatpush1.xpose.msra.mxu0 0.0
    %1176 = vmatprep.subr.mxu0 0.0
    %1177 = vmatpush1.xpose.msra.mxu0 0.0
    %1178 = vmatprep.subr.mxu0 0.0
    %1179 = vmatpush1.xpose.msra.mxu0 0.0
    %1180 = vmatprep.subr.mxu0 0.0
    %1181 = vmatpush1.xpose.msra.mxu0 0.0
    %1182 = vmatprep.subr.mxu0 0.0
    %1183 = vmatpush1.xpose.msra.mxu0 0.0
    %1184 = vmatprep.subr.mxu0 0.0
    %1185 = vmatpush1.xpose.msra.mxu0 0.0
    %1186 = vmatprep.subr.mxu0 0.0
    %1187 = vmatpush1.xpose.msra.mxu0 %v1154
    %1188 = vmatprep.subr.mxu0 0.0
    %1189 = vmatpush2.xpose.msra.mxu0 0.0
    %1190 = vmatprep.subr.mxu0 0.0
    %1191 = vmatpush2.xpose.msra.mxu0 0.0
    %1192 = vmatprep.subr.mxu0 0.0
    %1193 = vmatpush2.xpose.msra.mxu0 0.0
    %1194 = vmatprep.subr.mxu0 0.0
    %1195 = vmatpush2.xpose.msra.mxu0 0.0
    %1196 = vmatprep.subr.mxu0 0.0
    %1197 = vmatpush2.xpose.msra.mxu0 0.0
    %1198 = vmatprep.subr.mxu0 0.0
    %1199 = vmatpush2.xpose.msra.mxu0 0.0
    %1200 = vmatprep.subr.mxu0 0.0
    %1201 = vmatpush2.xpose.msra.mxu0 0.0
    %1202 = vmatprep.subr.mxu0 0.0
    %1203 = vmatpush2.xpose.msra.mxu0 0.0
    %1204 = vmatprep.subr.mxu0 0.0
    %1205 = vmatpush2.xpose.msra.mxu0 0.0
    %1206 = vmatprep.subr.mxu0 0.0
    %1207 = vmatpush2.xpose.msra.mxu0 0.0
    %1208 = vmatprep.subr.mxu0 0.0
    %1209 = vmatpush2.xpose.msra.mxu0 0.0
    %1210 = vmatprep.subr.mxu0 0.0
    %1211 = vmatpush2.xpose.msra.mxu0 0.0
    %1212 = vmatprep.subr.mxu0 0.0
    %1213 = vmatpush2.xpose.msra.mxu0 0.0
    %1214 = vmatprep.subr.mxu0 0.0
    %1215 = vmatpush2.xpose.msra.mxu0 0.0
    %1216 = vmatprep.subr.mxu0 0.0
    %1217 = vmatpush2.xpose.msra.mxu0 0.0
    %1218 = vmatprep.subr.mxu0 0.0
    %1219 = vmatpush2.xpose.msra.mxu0 0.0
    %1220 = vmatprep.mubr.f32.mxu0 0.0
    %1221 = vmatmul.mubr.f32.gmra.mxu0 %v1152
    %v1222 = vpop.f32.mrf.mxu0
    %v1223 = vadd.f32 0.0, %v1222
    %v1224 = vpop.f32.mrf.mxu0
    %1225 = vdwg.mxu0
    %v1226 = vsel %vm564, %v1145, -1000000.0
    %v1227 = vsel %vm565, %v1223, -1000000.0
    %v1228 = vsel %vm401, %v1226, -inf
    %1229 = vmax.xlane.f32.xlu0 %v1228
    %v1230 = vpop.xlane.xlu0 %1229
    %v1231 = vsel %vm401, %v1227, -inf
    %1232 = vmax.xlane.f32.xlu0 %v1231
    %v1233 = vpop.xlane.xlu0 %1232
    %v1234 = vsub.f32 %v1226, %v1230
    %v1235 = vsub.f32 %v1227, %v1233
    %v1236 = vmul.f32 %v1234, 1.442695
    %v1237 = vpow.pop %v1236
    %v1238 = vmul.f32 %v1235, 1.442695
    %v1239 = vpow.pop %v1238
    %v1240 = vsel %vm401, %v1237, 0.0
    %1241 = vadd.xlane.f32.xlu0 %v1240
    %v1242 = vpop.xlane.xlu0 %1241
    %v1243 = vsel %vm401, %v1239, 0.0
    %1244 = vadd.xlane.f32.xlu0 %v1243
    %v1245 = vpop.xlane.xlu0 %1244
    %v1246 = vrcp.pop %v1242
    %v1247 = vrcp.pop %v1245
    %v1248 = vmul.f32 %v1237, %v1246
    %v1249 = vmul.f32 %v1239, %v1247
    %1250 = vrot.lane.b32.xlu0 %v383, 112
    %v1251 = vpop.permute.xlu0 %1250
    %v1254 = vsel %vm401, %v1248, 0
    %1256 = vmatprep.subr.mxu0 0.0
    %1257 = vmatpush1.msra.mxu0 0.0
    %1258 = vmatprep.subr.mxu0 0.0
    %1259 = vmatpush1.msra.mxu0 0.0
    %1260 = vmatprep.subr.mxu0 0.0
    %1261 = vmatpush1.msra.mxu0 0.0
    %1262 = vmatprep.subr.mxu0 0.0
    %1263 = vmatpush1.msra.mxu0 0.0
    %1264 = vmatprep.subr.mxu0 0.0
    %1265 = vmatpush1.msra.mxu0 0.0
    %1266 = vmatprep.subr.mxu0 0.0
    %1267 = vmatpush1.msra.mxu0 0.0
    %1268 = vmatprep.subr.mxu0 0.0
    %1269 = vmatpush1.msra.mxu0 0.0
    %1270 = vmatprep.subr.mxu0 0.0
    %1271 = vmatpush1.msra.mxu0 0.0
    %1272 = vmatprep.subr.mxu0 0.0
    %1273 = vmatpush1.msra.mxu0 0.0
    %1274 = vmatprep.subr.mxu0 0.0
    %1275 = vmatpush1.msra.mxu0 0.0
    %1276 = vmatprep.subr.mxu0 0.0
    %1277 = vmatpush1.msra.mxu0 0.0
    %1278 = vmatprep.subr.mxu0 0.0
    %1279 = vmatpush1.msra.mxu0 0.0
    %1280 = vmatprep.subr.mxu0 0.0
    %1281 = vmatpush1.msra.mxu0 0.0
    %1282 = vmatprep.subr.mxu0 0.0
    %1283 = vmatpush1.msra.mxu0 0.0
    %1284 = vmatprep.subr.mxu0 0.0
    %1285 = vmatpush1.msra.mxu0 0.0
    %1286 = vmatprep.subr.mxu0 0.0
    %1287 = vmatpush1.msra.mxu0 %v1251
    %1288 = vmatprep.subr.mxu0 0.0
    %1289 = vmatpush2.msra.mxu0 0.0
    %1290 = vmatprep.subr.mxu0 0.0
    %1291 = vmatpush2.msra.mxu0 0.0
    %1292 = vmatprep.subr.mxu0 0.0
    %1293 = vmatpush2.msra.mxu0 0.0
    %1294 = vmatprep.subr.mxu0 0.0
    %1295 = vmatpush2.msra.mxu0 0.0
    %1296 = vmatprep.subr.mxu0 0.0
    %1297 = vmatpush2.msra.mxu0 0.0
    %1298 = vmatprep.subr.mxu0 0.0
    %1299 = vmatpush2.msra.mxu0 0.0
    %1300 = vmatprep.subr.mxu0 0.0
    %1301 = vmatpush2.msra.mxu0 0.0
    %1302 = vmatprep.subr.mxu0 0.0
    %1303 = vmatpush2.msra.mxu0 0.0
    %1304 = vmatprep.subr.mxu0 0.0
    %1305 = vmatpush2.msra.mxu0 0.0
    %1306 = vmatprep.subr.mxu0 0.0
    %1307 = vmatpush2.msra.mxu0 0.0
    %1308 = vmatprep.subr.mxu0 0.0
    %1309 = vmatpush2.msra.mxu0 0.0
    %1310 = vmatprep.subr.mxu0 0.0
    %1311 = vmatpush2.msra.mxu0 0.0
    %1312 = vmatprep.subr.mxu0 0.0
    %1313 = vmatpush2.msra.mxu0 0.0
    %1314 = vmatprep.subr.mxu0 0.0
    %1315 = vmatpush2.msra.mxu0 0.0
    %1316 = vmatprep.subr.mxu0 0.0
    %1317 = vmatpush2.msra.mxu0 0.0
    %1318 = vmatprep.subr.mxu0 0.0
    %1319 = vmatpush2.msra.mxu0 0.0
    %1320 = vmatprep.mubr.f32.mxu0 0.0
    %1321 = vmatmul.mubr.f32.gmra.mxu0 %v1254
    %v1322 = vpop.f32.mrf.mxu0
    %v1323 = vadd.f32 0.0, %v1322
    %v1324 = vpop.f32.mrf.mxu0
    %1325 = vdwg.mxu0
    %1326 = vrot.lane.b32.xlu0 %v388, 112
    %v1327 = vpop.permute.xlu0 %1326
    %v1330 = vsel %vm401, %v1249, 0
    %1332 = vmatprep.subr.mxu0 0.0
    %1333 = vmatpush1.msra.mxu0 0.0
    %1334 = vmatprep.subr.mxu0 0.0
    %1335 = vmatpush1.msra.mxu0 0.0
    %1336 = vmatprep.subr.mxu0 0.0
    %1337 = vmatpush1.msra.mxu0 0.0
    %1338 = vmatprep.subr.mxu0 0.0
    %1339 = vmatpush1.msra.mxu0 0.0
    %1340 = vmatprep.subr.mxu0 0.0
    %1341 = vmatpush1.msra.mxu0 0.0
    %1342 = vmatprep.subr.mxu0 0.0
    %1343 = vmatpush1.msra.mxu0 0.0
    %1344 = vmatprep.subr.mxu0 0.0
    %1345 = vmatpush1.msra.mxu0 0.0
    %1346 = vmatprep.subr.mxu0 0.0
    %1347 = vmatpush1.msra.mxu0 0.0
    %1348 = vmatprep.subr.mxu0 0.0
    %1349 = vmatpush1.msra.mxu0 0.0
    %1350 = vmatprep.subr.mxu0 0.0
    %1351 = vmatpush1.msra.mxu0 0.0
    %1352 = vmatprep.subr.mxu0 0.0
    %1353 = vmatpush1.msra.mxu0 0.0
    %1354 = vmatprep.subr.mxu0 0.0
    %1355 = vmatpush1.msra.mxu0 0.0
    %1356 = vmatprep.subr.mxu0 0.0
    %1357 = vmatpush1.msra.mxu0 0.0
    %1358 = vmatprep.subr.mxu0 0.0
    %1359 = vmatpush1.msra.mxu0 0.0
    %1360 = vmatprep.subr.mxu0 0.0
    %1361 = vmatpush1.msra.mxu0 0.0
    %1362 = vmatprep.subr.mxu0 0.0
    %1363 = vmatpush1.msra.mxu0 %v1327
    %1364 = vmatprep.subr.mxu0 0.0
    %1365 = vmatpush2.msra.mxu0 0.0
    %1366 = vmatprep.subr.mxu0 0.0
    %1367 = vmatpush2.msra.mxu0 0.0
    %1368 = vmatprep.subr.mxu0 0.0
    %1369 = vmatpush2.msra.mxu0 0.0
    %1370 = vmatprep.subr.mxu0 0.0
    %1371 = vmatpush2.msra.mxu0 0.0
    %1372 = vmatprep.subr.mxu0 0.0
    %1373 = vmatpush2.msra.mxu0 0.0
    %1374 = vmatprep.subr.mxu0 0.0
    %1375 = vmatpush2.msra.mxu0 0.0
    %1376 = vmatprep.subr.mxu0 0.0
    %1377 = vmatpush2.msra.mxu0 0.0
    %1378 = vmatprep.subr.mxu0 0.0
    %1379 = vmatpush2.msra.mxu0 0.0
    %1380 = vmatprep.subr.mxu0 0.0
    %1381 = vmatpush2.msra.mxu0 0.0
    %1382 = vmatprep.subr.mxu0 0.0
    %1383 = vmatpush2.msra.mxu0 0.0
    %1384 = vmatprep.subr.mxu0 0.0
    %1385 = vmatpush2.msra.mxu0 0.0
    %1386 = vmatprep.subr.mxu0 0.0
    %1387 = vmatpush2.msra.mxu0 0.0
    %1388 = vmatprep.subr.mxu0 0.0
    %1389 = vmatpush2.msra.mxu0 0.0
    %1390 = vmatprep.subr.mxu0 0.0
    %1391 = vmatpush2.msra.mxu0 0.0
    %1392 = vmatprep.subr.mxu0 0.0
    %1393 = vmatpush2.msra.mxu0 0.0
    %1394 = vmatprep.subr.mxu0 0.0
    %1395 = vmatpush2.msra.mxu0 0.0
    %1396 = vmatprep.mubr.f32.mxu0 0.0
    %1397 = vmatmul.mubr.f32.gmra.mxu0 %v1330
    %v1398 = vpop.f32.mrf.mxu0
    %v1399 = vadd.f32 0.0, %v1398
    %v1400 = vpop.f32.mrf.mxu0
    %1401 = vdwg.mxu0
    %1402 = vrot.lane.b32.xlu0 %v219, 104
    %v1403 = vpop.permute.xlu0 %1402
    %1404 = vrot.lane.b32.xlu0 %v298, 104
    %v1405 = vpop.permute.xlu0 %1404
    %v1406 = vsel %vm401, %v1403, 0
    %v1408 = vsel %vm401, %v1405, 0
    %1410 = vmatprep.subr.mxu0 0.0
    %1411 = vmatpush1.xpose.msra.mxu0 0.0
    %1412 = vmatprep.subr.mxu0 0.0
    %1413 = vmatpush1.xpose.msra.mxu0 0.0
    %1414 = vmatprep.subr.mxu0 0.0
    %1415 = vmatpush1.xpose.msra.mxu0 0.0
    %1416 = vmatprep.subr.mxu0 0.0
    %1417 = vmatpush1.xpose.msra.mxu0 0.0
    %1418 = vmatprep.subr.mxu0 0.0
    %1419 = vmatpush1.xpose.msra.mxu0 0.0
    %1420 = vmatprep.subr.mxu0 0.0
    %1421 = vmatpush1.xpose.msra.mxu0 0.0
    %1422 = vmatprep.subr.mxu0 0.0
    %1423 = vmatpush1.xpose.msra.mxu0 0.0
    %1424 = vmatprep.subr.mxu0 0.0
    %1425 = vmatpush1.xpose.msra.mxu0 0.0
    %1426 = vmatprep.subr.mxu0 0.0
    %1427 = vmatpush1.xpose.msra.mxu0 0.0
    %1428 = vmatprep.subr.mxu0 0.0
    %1429 = vmatpush1.xpose.msra.mxu0 0.0
    %1430 = vmatprep.subr.mxu0 0.0
    %1431 = vmatpush1.xpose.msra.mxu0 0.0
    %1432 = vmatprep.subr.mxu0 0.0
    %1433 = vmatpush1.xpose.msra.mxu0 0.0
    %1434 = vmatprep.subr.mxu0 0.0
    %1435 = vmatpush1.xpose.msra.mxu0 0.0
    %1436 = vmatprep.subr.mxu0 0.0
    %1437 = vmatpush1.xpose.msra.mxu0 0.0
    %1438 = vmatprep.subr.mxu0 0.0
    %1439 = vmatpush1.xpose.msra.mxu0 0.0
    %1440 = vmatprep.subr.mxu0 0.0
    %1441 = vmatpush1.xpose.msra.mxu0 %v1408
    %1442 = vmatprep.subr.mxu0 0.0
    %1443 = vmatpush2.xpose.msra.mxu0 0.0
    %1444 = vmatprep.subr.mxu0 0.0
    %1445 = vmatpush2.xpose.msra.mxu0 0.0
    %1446 = vmatprep.subr.mxu0 0.0
    %1447 = vmatpush2.xpose.msra.mxu0 0.0
    %1448 = vmatprep.subr.mxu0 0.0
    %1449 = vmatpush2.xpose.msra.mxu0 0.0
    %1450 = vmatprep.subr.mxu0 0.0
    %1451 = vmatpush2.xpose.msra.mxu0 0.0
    %1452 = vmatprep.subr.mxu0 0.0
    %1453 = vmatpush2.xpose.msra.mxu0 0.0
    %1454 = vmatprep.subr.mxu0 0.0
    %1455 = vmatpush2.xpose.msra.mxu0 0.0
    %1456 = vmatprep.subr.mxu0 0.0
    %1457 = vmatpush2.xpose.msra.mxu0 0.0
    %1458 = vmatprep.subr.mxu0 0.0
    %1459 = vmatpush2.xpose.msra.mxu0 0.0
    %1460 = vmatprep.subr.mxu0 0.0
    %1461 = vmatpush2.xpose.msra.mxu0 0.0
    %1462 = vmatprep.subr.mxu0 0.0
    %1463 = vmatpush2.xpose.msra.mxu0 0.0
    %1464 = vmatprep.subr.mxu0 0.0
    %1465 = vmatpush2.xpose.msra.mxu0 0.0
    %1466 = vmatprep.subr.mxu0 0.0
    %1467 = vmatpush2.xpose.msra.mxu0 0.0
    %1468 = vmatprep.subr.mxu0 0.0
    %1469 = vmatpush2.xpose.msra.mxu0 0.0
    %1470 = vmatprep.subr.mxu0 0.0
    %1471 = vmatpush2.xpose.msra.mxu0 0.0
    %1472 = vmatprep.subr.mxu0 0.0
    %1473 = vmatpush2.xpose.msra.mxu0 0.0
    %1474 = vmatprep.mubr.f32.mxu0 0.0
    %1475 = vmatmul.mubr.f32.gmra.mxu0 %v1406
    %v1476 = vpop.f32.mrf.mxu0
    %v1477 = vadd.f32 0.0, %v1476
    %v1478 = vpop.f32.mrf.mxu0
    %1479 = vdwg.mxu0
    %1480 = vrot.lane.b32.xlu0 %v220, 104
    %v1481 = vpop.permute.xlu0 %1480
    %1482 = vrot.lane.b32.xlu0 %v303, 104
    %v1483 = vpop.permute.xlu0 %1482
    %v1484 = vsel %vm401, %v1481, 0
    %v1486 = vsel %vm401, %v1483, 0
    %1488 = vmatprep.subr.mxu0 0.0
    %1489 = vmatpush1.xpose.msra.mxu0 0.0
    %1490 = vmatprep.subr.mxu0 0.0
    %1491 = vmatpush1.xpose.msra.mxu0 0.0
    %1492 = vmatprep.subr.mxu0 0.0
    %1493 = vmatpush1.xpose.msra.mxu0 0.0
    %1494 = vmatprep.subr.mxu0 0.0
    %1495 = vmatpush1.xpose.msra.mxu0 0.0
    %1496 = vmatprep.subr.mxu0 0.0
    %1497 = vmatpush1.xpose.msra.mxu0 0.0
    %1498 = vmatprep.subr.mxu0 0.0
    %1499 = vmatpush1.xpose.msra.mxu0 0.0
    %1500 = vmatprep.subr.mxu0 0.0
    %1501 = vmatpush1.xpose.msra.mxu0 0.0
    %1502 = vmatprep.subr.mxu0 0.0
    %1503 = vmatpush1.xpose.msra.mxu0 0.0
    %1504 = vmatprep.subr.mxu0 0.0
    %1505 = vmatpush1.xpose.msra.mxu0 0.0
    %1506 = vmatprep.subr.mxu0 0.0
    %1507 = vmatpush1.xpose.msra.mxu0 0.0
    %1508 = vmatprep.subr.mxu0 0.0
    %1509 = vmatpush1.xpose.msra.mxu0 0.0
    %1510 = vmatprep.subr.mxu0 0.0
    %1511 = vmatpush1.xpose.msra.mxu0 0.0
    %1512 = vmatprep.subr.mxu0 0.0
    %1513 = vmatpush1.xpose.msra.mxu0 0.0
    %1514 = vmatprep.subr.mxu0 0.0
    %1515 = vmatpush1.xpose.msra.mxu0 0.0
    %1516 = vmatprep.subr.mxu0 0.0
    %1517 = vmatpush1.xpose.msra.mxu0 0.0
    %1518 = vmatprep.subr.mxu0 0.0
    %1519 = vmatpush1.xpose.msra.mxu0 %v1486
    %1520 = vmatprep.subr.mxu0 0.0
    %1521 = vmatpush2.xpose.msra.mxu0 0.0
    %1522 = vmatprep.subr.mxu0 0.0
    %1523 = vmatpush2.xpose.msra.mxu0 0.0
    %1524 = vmatprep.subr.mxu0 0.0
    %1525 = vmatpush2.xpose.msra.mxu0 0.0
    %1526 = vmatprep.subr.mxu0 0.0
    %1527 = vmatpush2.xpose.msra.mxu0 0.0
    %1528 = vmatprep.subr.mxu0 0.0
    %1529 = vmatpush2.xpose.msra.mxu0 0.0
    %1530 = vmatprep.subr.mxu0 0.0
    %1531 = vmatpush2.xpose.msra.mxu0 0.0
    %1532 = vmatprep.subr.mxu0 0.0
    %1533 = vmatpush2.xpose.msra.mxu0 0.0
    %1534 = vmatprep.subr.mxu0 0.0
    %1535 = vmatpush2.xpose.msra.mxu0 0.0
    %1536 = vmatprep.subr.mxu0 0.0
    %1537 = vmatpush2.xpose.msra.mxu0 0.0
    %1538 = vmatprep.subr.mxu0 0.0
    %1539 = vmatpush2.xpose.msra.mxu0 0.0
    %1540 = vmatprep.subr.mxu0 0.0
    %1541 = vmatpush2.xpose.msra.mxu0 0.0
    %1542 = vmatprep.subr.mxu0 0.0
    %1543 = vmatpush2.xpose.msra.mxu0 0.0
    %1544 = vmatprep.subr.mxu0 0.0
    %1545 = vmatpush2.xpose.msra.mxu0 0.0
    %1546 = vmatprep.subr.mxu0 0.0
    %1547 = vmatpush2.xpose.msra.mxu0 0.0
    %1548 = vmatprep.subr.mxu0 0.0
    %1549 = vmatpush2.xpose.msra.mxu0 0.0
    %1550 = vmatprep.subr.mxu0 0.0
    %1551 = vmatpush2.xpose.msra.mxu0 0.0
    %1552 = vmatprep.mubr.f32.mxu0 0.0
    %1553 = vmatmul.mubr.f32.gmra.mxu0 %v1484
    %v1554 = vpop.f32.mrf.mxu0
    %v1555 = vadd.f32 0.0, %v1554
    %v1556 = vpop.f32.mrf.mxu0
    %1557 = vdwg.mxu0
    %v1558 = vsel %vm564, %v1477, -1000000.0
    %v1559 = vsel %vm565, %v1555, -1000000.0
    %v1560 = vsel %vm401, %v1558, -inf
    %1561 = vmax.xlane.f32.xlu0 %v1560
    %v1562 = vpop.xlane.xlu0 %1561
    %v1563 = vsel %vm401, %v1559, -inf
    %1564 = vmax.xlane.f32.xlu0 %v1563
    %v1565 = vpop.xlane.xlu0 %1564
    %v1566 = vsub.f32 %v1558, %v1562
    %v1567 = vsub.f32 %v1559, %v1565
    %v1568 = vmul.f32 %v1566, 1.442695
    %v1569 = vpow.pop %v1568
    %v1570 = vmul.f32 %v1567, 1.442695
    %v1571 = vpow.pop %v1570
    %v1572 = vsel %vm401, %v1569, 0.0
    %1573 = vadd.xlane.f32.xlu0 %v1572
    %v1574 = vpop.xlane.xlu0 %1573
    %v1575 = vsel %vm401, %v1571, 0.0
    %1576 = vadd.xlane.f32.xlu0 %v1575
    %v1577 = vpop.xlane.xlu0 %1576
    %v1578 = vrcp.pop %v1574
    %v1579 = vrcp.pop %v1577
    %v1580 = vmul.f32 %v1569, %v1578
    %v1581 = vmul.f32 %v1571, %v1579
    %1582 = vrot.lane.b32.xlu0 %v383, 104
    %v1583 = vpop.permute.xlu0 %1582
    %v1586 = vsel %vm401, %v1580, 0
    %1588 = vmatprep.subr.mxu0 0.0
    %1589 = vmatpush1.msra.mxu0 0.0
    %1590 = vmatprep.subr.mxu0 0.0
    %1591 = vmatpush1.msra.mxu0 0.0
    %1592 = vmatprep.subr.mxu0 0.0
    %1593 = vmatpush1.msra.mxu0 0.0
    %1594 = vmatprep.subr.mxu0 0.0
    %1595 = vmatpush1.msra.mxu0 0.0
    %1596 = vmatprep.subr.mxu0 0.0
    %1597 = vmatpush1.msra.mxu0 0.0
    %1598 = vmatprep.subr.mxu0 0.0
    %1599 = vmatpush1.msra.mxu0 0.0
    %1600 = vmatprep.subr.mxu0 0.0
    %1601 = vmatpush1.msra.mxu0 0.0
    %1602 = vmatprep.subr.mxu0 0.0
    %1603 = vmatpush1.msra.mxu0 0.0
    %1604 = vmatprep.subr.mxu0 0.0
    %1605 = vmatpush1.msra.mxu0 0.0
    %1606 = vmatprep.subr.mxu0 0.0
    %1607 = vmatpush1.msra.mxu0 0.0
    %1608 = vmatprep.subr.mxu0 0.0
    %1609 = vmatpush1.msra.mxu0 0.0
    %1610 = vmatprep.subr.mxu0 0.0
    %1611 = vmatpush1.msra.mxu0 0.0
    %1612 = vmatprep.subr.mxu0 0.0
    %1613 = vmatpush1.msra.mxu0 0.0
    %1614 = vmatprep.subr.mxu0 0.0
    %1615 = vmatpush1.msra.mxu0 0.0
    %1616 = vmatprep.subr.mxu0 0.0
    %1617 = vmatpush1.msra.mxu0 0.0
    %1618 = vmatprep.subr.mxu0 0.0
    %1619 = vmatpush1.msra.mxu0 %v1583
    %1620 = vmatprep.subr.mxu0 0.0
    %1621 = vmatpush2.msra.mxu0 0.0
    %1622 = vmatprep.subr.mxu0 0.0
    %1623 = vmatpush2.msra.mxu0 0.0
    %1624 = vmatprep.subr.mxu0 0.0
    %1625 = vmatpush2.msra.mxu0 0.0
    %1626 = vmatprep.subr.mxu0 0.0
    %1627 = vmatpush2.msra.mxu0 0.0
    %1628 = vmatprep.subr.mxu0 0.0
    %1629 = vmatpush2.msra.mxu0 0.0
    %1630 = vmatprep.subr.mxu0 0.0
    %1631 = vmatpush2.msra.mxu0 0.0
    %1632 = vmatprep.subr.mxu0 0.0
    %1633 = vmatpush2.msra.mxu0 0.0
    %1634 = vmatprep.subr.mxu0 0.0
    %1635 = vmatpush2.msra.mxu0 0.0
    %1636 = vmatprep.subr.mxu0 0.0
    %1637 = vmatpush2.msra.mxu0 0.0
    %1638 = vmatprep.subr.mxu0 0.0
    %1639 = vmatpush2.msra.mxu0 0.0
    %1640 = vmatprep.subr.mxu0 0.0
    %1641 = vmatpush2.msra.mxu0 0.0
    %1642 = vmatprep.subr.mxu0 0.0
    %1643 = vmatpush2.msra.mxu0 0.0
    %1644 = vmatprep.subr.mxu0 0.0
    %1645 = vmatpush2.msra.mxu0 0.0
    %1646 = vmatprep.subr.mxu0 0.0
    %1647 = vmatpush2.msra.mxu0 0.0
    %1648 = vmatprep.subr.mxu0 0.0
    %1649 = vmatpush2.msra.mxu0 0.0
    %1650 = vmatprep.subr.mxu0 0.0
    %1651 = vmatpush2.msra.mxu0 0.0
    %1652 = vmatprep.mubr.f32.mxu0 0.0
    %1653 = vmatmul.mubr.f32.gmra.mxu0 %v1586
    %v1654 = vpop.f32.mrf.mxu0
    %v1655 = vadd.f32 0.0, %v1654
    %v1656 = vpop.f32.mrf.mxu0
    %1657 = vdwg.mxu0
    %1658 = vrot.lane.b32.xlu0 %v388, 104
    %v1659 = vpop.permute.xlu0 %1658
    %v1662 = vsel %vm401, %v1581, 0
    %1664 = vmatprep.subr.mxu0 0.0
    %1665 = vmatpush1.msra.mxu0 0.0
    %1666 = vmatprep.subr.mxu0 0.0
    %1667 = vmatpush1.msra.mxu0 0.0
    %1668 = vmatprep.subr.mxu0 0.0
    %1669 = vmatpush1.msra.mxu0 0.0
    %1670 = vmatprep.subr.mxu0 0.0
    %1671 = vmatpush1.msra.mxu0 0.0
    %1672 = vmatprep.subr.mxu0 0.0
    %1673 = vmatpush1.msra.mxu0 0.0
    %1674 = vmatprep.subr.mxu0 0.0
    %1675 = vmatpush1.msra.mxu0 0.0
    %1676 = vmatprep.subr.mxu0 0.0
    %1677 = vmatpush1.msra.mxu0 0.0
    %1678 = vmatprep.subr.mxu0 0.0
    %1679 = vmatpush1.msra.mxu0 0.0
    %1680 = vmatprep.subr.mxu0 0.0
    %1681 = vmatpush1.msra.mxu0 0.0
    %1682 = vmatprep.subr.mxu0 0.0
    %1683 = vmatpush1.msra.mxu0 0.0
    %1684 = vmatprep.subr.mxu0 0.0
    %1685 = vmatpush1.msra.mxu0 0.0
    %1686 = vmatprep.subr.mxu0 0.0
    %1687 = vmatpush1.msra.mxu0 0.0
    %1688 = vmatprep.subr.mxu0 0.0
    %1689 = vmatpush1.msra.mxu0 0.0
    %1690 = vmatprep.subr.mxu0 0.0
    %1691 = vmatpush1.msra.mxu0 0.0
    %1692 = vmatprep.subr.mxu0 0.0
    %1693 = vmatpush1.msra.mxu0 0.0
    %1694 = vmatprep.subr.mxu0 0.0
    %1695 = vmatpush1.msra.mxu0 %v1659
    %1696 = vmatprep.subr.mxu0 0.0
    %1697 = vmatpush2.msra.mxu0 0.0
    %1698 = vmatprep.subr.mxu0 0.0
    %1699 = vmatpush2.msra.mxu0 0.0
    %1700 = vmatprep.subr.mxu0 0.0
    %1701 = vmatpush2.msra.mxu0 0.0
    %1702 = vmatprep.subr.mxu0 0.0
    %1703 = vmatpush2.msra.mxu0 0.0
    %1704 = vmatprep.subr.mxu0 0.0
    %1705 = vmatpush2.msra.mxu0 0.0
    %1706 = vmatprep.subr.mxu0 0.0
    %1707 = vmatpush2.msra.mxu0 0.0
    %1708 = vmatprep.subr.mxu0 0.0
    %1709 = vmatpush2.msra.mxu0 0.0
    %1710 = vmatprep.subr.mxu0 0.0
    %1711 = vmatpush2.msra.mxu0 0.0
    %1712 = vmatprep.subr.mxu0 0.0
    %1713 = vmatpush2.msra.mxu0 0.0
    %1714 = vmatprep.subr.mxu0 0.0
    %1715 = vmatpush2.msra.mxu0 0.0
    %1716 = vmatprep.subr.mxu0 0.0
    %1717 = vmatpush2.msra.mxu0 0.0
    %1718 = vmatprep.subr.mxu0 0.0
    %1719 = vmatpush2.msra.mxu0 0.0
    %1720 = vmatprep.subr.mxu0 0.0
    %1721 = vmatpush2.msra.mxu0 0.0
    %1722 = vmatprep.subr.mxu0 0.0
    %1723 = vmatpush2.msra.mxu0 0.0
    %1724 = vmatprep.subr.mxu0 0.0
    %1725 = vmatpush2.msra.mxu0 0.0
    %1726 = vmatprep.subr.mxu0 0.0
    %1727 = vmatpush2.msra.mxu0 0.0
    %1728 = vmatprep.mubr.f32.mxu0 0.0
    %1729 = vmatmul.mubr.f32.gmra.mxu0 %v1662
    %v1730 = vpop.f32.mrf.mxu0
    %v1731 = vadd.f32 0.0, %v1730
    %v1732 = vpop.f32.mrf.mxu0
    %1733 = vdwg.mxu0
    %1736 = vrot.lane.b32.xlu0 %v990, 8
    %v1737 = vpop.permute.xlu0 %1736
    %1738 = vrot.lane.b32.xlu0 %v1067, 8
    %v1739 = vpop.permute.xlu0 %1738
    %1744 = vrot.lane.b32.xlu0 %v1323, 16
    %v1745 = vpop.permute.xlu0 %1744
    %1746 = vrot.lane.b32.xlu0 %v1399, 16
    %v1747 = vpop.permute.xlu0 %1746
    %1752 = vrot.lane.b32.xlu0 %v1655, 24
    %v1753 = vpop.permute.xlu0 %1752
    %1754 = vrot.lane.b32.xlu0 %v1731, 24
    %v1755 = vpop.permute.xlu0 %1754
    %v1758 = vsel %vm401, %v660, %v1737
    %v1759 = vsel %vm401, %v733, %v1739
    %vm1760 = vcmask 130048
    %v1761 = vsel %vm1760, %v1758, %v1745
    %v1762 = vsel %vm1760, %v1759, %v1747
    %vm1763 = vcmask 195584
    %v1764 = vsel %vm1763, %v1761, %v1753
    %v1765 = vsel %vm1763, %v1762, %v1755
    %v1766 = vld [vmem:[#allocation15] sm:$0xff]
    %v1767 = vld [vmem:[#allocation15 + $0x8] sm:$0xff]
    %v1768 = vld [vmem:[#allocation15 + $0x10] sm:$0xff]
    %v1769 = vld [vmem:[#allocation15 + $0x18] sm:$0xff]
    %v1771 = vsel %vm137, %v1764, 0
    %v1774 = vsel %vm137, %v1765, 0
    %1776 = vmatprep.subr.mxu0 0.0
    %1777 = vmatpush1.msra.mxu0 0.0
    %1778 = vmatprep.subr.mxu0 0.0
    %1779 = vmatpush1.msra.mxu0 0.0
    %1780 = vmatprep.subr.mxu0 0.0
    %1781 = vmatpush1.msra.mxu0 0.0
    %1782 = vmatprep.subr.mxu0 0.0
    %1783 = vmatpush1.msra.mxu0 0.0
    %1784 = vmatprep.subr.mxu0 0.0
    %1785 = vmatpush1.msra.mxu0 0.0
    %1786 = vmatprep.subr.mxu0 0.0
    %1787 = vmatpush1.msra.mxu0 0.0
    %1788 = vmatprep.subr.mxu0 0.0
    %1789 = vmatpush1.msra.mxu0 0.0
    %1790 = vmatprep.subr.mxu0 0.0
    %1791 = vmatpush1.msra.mxu0 0.0
    %1792 = vmatprep.subr.mxu0 0.0
    %1793 = vmatpush1.msra.mxu0 0.0
    %1794 = vmatprep.subr.mxu0 0.0
    %1795 = vmatpush1.msra.mxu0 0.0
    %1796 = vmatprep.subr.mxu0 0.0
    %1797 = vmatpush1.msra.mxu0 0.0
    %1798 = vmatprep.subr.mxu0 0.0
    %1799 = vmatpush1.msra.mxu0 0.0
    %1800 = vmatprep.subr.mxu0 0.0
    %1801 = vmatpush1.msra.mxu0 %v1769
    %1802 = vmatprep.subr.mxu0 0.0
    %1803 = vmatpush1.msra.mxu0 %v1768
    %1804 = vmatprep.subr.mxu0 0.0
    %1805 = vmatpush1.msra.mxu0 %v1767
    %1806 = vmatprep.subr.mxu0 0.0
    %1807 = vmatpush1.msra.mxu0 %v1766
    %1808 = vmatprep.subr.mxu0 0.0
    %1809 = vmatpush2.msra.mxu0 0.0
    %1810 = vmatprep.subr.mxu0 0.0
    %1811 = vmatpush2.msra.mxu0 0.0
    %1812 = vmatprep.subr.mxu0 0.0
    %1813 = vmatpush2.msra.mxu0 0.0
    %1814 = vmatprep.subr.mxu0 0.0
    %1815 = vmatpush2.msra.mxu0 0.0
    %1816 = vmatprep.subr.mxu0 0.0
    %1817 = vmatpush2.msra.mxu0 0.0
    %1818 = vmatprep.subr.mxu0 0.0
    %1819 = vmatpush2.msra.mxu0 0.0
    %1820 = vmatprep.subr.mxu0 0.0
    %1821 = vmatpush2.msra.mxu0 0.0
    %1822 = vmatprep.subr.mxu0 0.0
    %1823 = vmatpush2.msra.mxu0 0.0
    %1824 = vmatprep.subr.mxu0 0.0
    %1825 = vmatpush2.msra.mxu0 0.0
    %1826 = vmatprep.subr.mxu0 0.0
    %1827 = vmatpush2.msra.mxu0 0.0
    %1828 = vmatprep.subr.mxu0 0.0
    %1829 = vmatpush2.msra.mxu0 0.0
    %1830 = vmatprep.subr.mxu0 0.0
    %1831 = vmatpush2.msra.mxu0 0.0
    %1832 = vmatprep.subr.mxu0 0.0
    %1833 = vmatpush2.msra.mxu0 0.0
    %1834 = vmatprep.subr.mxu0 0.0
    %1835 = vmatpush2.msra.mxu0 0.0
    %1836 = vmatprep.subr.mxu0 0.0
    %1837 = vmatpush2.msra.mxu0 0.0
    %1838 = vmatprep.subr.mxu0 0.0
    %1839 = vmatpush2.msra.mxu0 0.0
    %1840 = vmatprep.mubr.f32.mxu0 0.0
    %1841 = vmatmul.mubr.f32.gmra.mxu0 %v1771
    %v1842 = vpop.f32.mrf.mxu0
    %v1843 = vadd.f32 0.0, %v1842
    %v1844 = vpop.f32.mrf.mxu0
    %1845 = vmatprep.mubr.f32.mxu0 0.0
    %1846 = vmatmul.mubr.f32.gmra.mxu0 %v1774
    %v1847 = vpop.f32.mrf.mxu0
    %v1848 = vadd.f32 0.0, %v1847
    %v1849 = vpop.f32.mrf.mxu0
    %1850 = vdwg.mxu0
    %1851 = vst.msk [vmem:[#allocation16] sm:$0xff] %vm137, %v1843
    %1852 = vst.msk [vmem:[#allocation16 + $0x8] sm:$0xff] %vm137, %v1848
    // Predicated region
    $region58: #{tpu_custom_call.1} parent=1 // pred_check
      _
    $region59: #{tpu_custom_call.1} parent=1 // pred_check_branch
      %1854 = sbr.rel (0) target = $region61
    $region60: #{tpu_custom_call.1} parent=1 // pred_region
      %s1856 = ssub.s32 256, 256
      %1857 = vsyncadd [#allocation6], %s1856
      %s1858 = sshll.u32 [#allocation16], 4
      %s1859 = int_to_ptr.vmem [resolvable:$true] %s1858
      %1864 = dma.vmem_to_hbm [thread:$0]  %s1859, 256, %s8, [#allocation6], 128, 128, 8
    $region61: #{tpu_custom_call.1} parent=1 // pred_fallthru
      _
    // Predicated region
    $region62: #{tpu_custom_call.1} parent=1 // pred_check
      _
    $region63: #{tpu_custom_call.1} parent=1 // pred_check_branch
      %1866 = sbr.rel (0) target = $region65
    $region64: #{tpu_custom_call.1} parent=1 // pred_region
      %1867 = dma.done [#allocation6], 256
    $region65: #{tpu_custom_call.1} parent=1 // pred_fallthru
      _
    %1868 = vsyncpa [#allocation5], 1
    %1869 = vsyncpa [#allocation8], 1
    %1870 = vsyncpa [#allocation11], 1
    %1871 = vsyncpa [#allocation14], 1
    %1872 = vsyncpa [#allocation6], 1

</llo_original>
